<compile_context>
chip_gen: v7x
topology: tpu7x:2x2x1
jax: 0.10.0
libtpu: 0.0.40
codegen_flags: <defaults>
</compile_context>

<pallas_src>
import functools

import jax
import jax.numpy as jnp
from jax import lax
from jax.experimental import pallas as pl
from jax.experimental.pallas import tpu as pltpu


def _pick_tile(dim, target):
    """Largest 128-multiple tile <= target that divides dim, else full dim."""
    if dim <= target:
        return dim
    t = (target // 128) * 128
    while t >= 128:
        if dim % t == 0:
            return t
        t -= 128
    return dim  # fallback: full extent (always legal as a block dim)


def _vmem_bytes(tq, tkv, S, D, itemsize, has_mask):
    """Rough VMEM footprint (double-buffered blocks + scratch), in bytes."""
    lane = lambda n: -(-n // 128) * 128
    sub = lambda n: -(-n // 8) * 8
    nkv = S // tkv
    b = 0
    b += 2 * sub(tq) * lane(D) * itemsize        # q blocks (x2 buffers)
    b += 2 * 2 * sub(tkv) * lane(D) * itemsize   # k, v blocks
    b += 2 * sub(tq) * lane(D) * itemsize        # out blocks
    b += 2 * sub(tq) * lane(S) * itemsize        # attn blocks (resident slab)
    if has_mask:
        b += 2 * sub(tq) * lane(tkv) * 1         # int8 mask blocks
    b += 2 * sub(tq) * 128 * 4                   # m, l scratch
    b += sub(tq) * lane(D) * 4                   # acc scratch
    b += nkv * sub(tq) * 128 * 4                 # per-KV-tile max scratch
    return b


def _flash_sdpa_kernel(*refs, has_mask, tkv, nkv):
    if has_mask:
        (q_ref, k_ref, v_ref, mask_ref, out_ref, attn_ref,
         m_sc, l_sc, acc_sc, mtile_sc) = refs
    else:
        (q_ref, k_ref, v_ref, out_ref, attn_ref,
         m_sc, l_sc, acc_sc, mtile_sc) = refs
        mask_ref = None

    ki = pl.program_id(2)

    @pl.when(ki == 0)
    def _init():
        m_sc[...] = jnp.full_like(m_sc, -jnp.inf)
        l_sc[...] = jnp.zeros_like(l_sc)
        acc_sc[...] = jnp.zeros_like(acc_sc)

    # scores = q . k^T : contract the head dim of both operands directly
    # (no explicit transpose; native-dtype inputs, f32 accumulation).
    s = lax.dot_general(
        q_ref[...], k_ref[...],
        dimension_numbers=(((1,), (1,)), ((), ())),
        preferred_element_type=jnp.float32)                       # (tq, tkv)

    if mask_ref is not None:
        s = jnp.where(mask_ref[...] != 0, s, jnp.float32(-1000000000.0))

    # Online-softmax update.
    m_prev = m_sc[...]
    m_new = jnp.maximum(m_prev, jnp.max(s, axis=-1, keepdims=True))
    alpha = jnp.exp(m_prev - m_new)
    p = jnp.exp(s - m_new)                                        # (tq, tkv)

    # Write the already-exponentiated block straight into the resident attn
    # output block and remember this step's running max; finalize rescales to
    # the final max (no second full-slab exp, no separate f32 (tq, S) scratch).
    col = pl.multiple_of(ki * tkv, tkv)
    attn_ref[:, pl.ds(col, tkv)] = p.astype(attn_ref.dtype)
    mtile_sc[ki] = m_new

    l_sc[...] = alpha * l_sc[...] + jnp.sum(p, axis=-1, keepdims=True)
    # NOTE: for v5e with f32 inputs, pre-casting q/k/v to bf16 in the wrapper
    # (and p below) roughly doubles MXU rate / halves K-V DMA; kept opt-out
    # here to preserve bit-level behavior of the f32 module.
    acc_sc[...] = alpha * acc_sc[...] + jnp.dot(
        p.astype(v_ref.dtype), v_ref[...], preferred_element_type=jnp.float32)
    m_sc[...] = m_new

    @pl.when(ki == pl.num_programs(2) - 1)
    def _finalize():
        # Exact reciprocal: attn rows sum to 1 and the output matches the
        # reference to f32 accuracy (the approx reciprocal was a ~1e-3 rel
        # error source).  It runs once per Q tile, so the cost is negligible.
        inv_l = 1.0 / l_sc[...]
        m_fin = m_sc[...]
        # TODO(synk): nn.Dropout(0.3) is identity in eval mode; training-mode
        # dropout (pltpu.prng_seed / prng_random_bits, scale by 1/(1-p)) is
        # not reproduced here.
        out_ref[...] = (acc_sc[...] * inv_l).astype(out_ref.dtype)
        for j in range(nkv):  # static unroll; each block is a broadcast mul
            scale = jnp.exp(mtile_sc[j] - m_fin) * inv_l          # (tq, 1)
            blk = attn_ref[:, j * tkv:(j + 1) * tkv].astype(jnp.float32)
            attn_ref[:, j * tkv:(j + 1) * tkv] = (blk * scale).astype(
                attn_ref.dtype)


def scaled_dot_product_attention(q, k, v, mask=None, *, tq=256, tkv=512):
    """Pallas TPU ScaledDotProductAttention.forward (eval mode).

    Returns (output, attn) exactly like the PyTorch module (same dtype as q).
    """
    B, H, S, D = q.shape
    out_dtype = q.dtype
    itemsize = jnp.dtype(out_dtype).itemsize
    has_mask = mask is not None

    # Collapse (B, H) into one flat, megacore-friendly parallel axis.
    BH = B * H
    q3 = q.reshape(BH, S, D)
    k3 = k.reshape(BH, S, D)
    v3 = v.reshape(BH, S, D)

    tq = _pick_tile(S, tq)
    tkv = _pick_tile(S, tkv)

    # Derate the Q tile so the resident (tq, S) attn block (x2 buffers) plus
    # scratch fits a conservative VMEM budget (v7x has only 64 MiB total).
    budget = 48 * 1024 * 1024
    while tq > 128 and _vmem_bytes(tq, tkv, S, D, itemsize, has_mask) > budget:
        new_tq = _pick_tile(S, max(128, tq // 2))
        if new_tq >= tq:
            break
        tq = new_tq

    nq, nkv = S // tq, S // tkv
    grid = (BH, nq, nkv)

    q_spec = pl.BlockSpec((None, tq, D), lambda bh, qi, ki: (bh, qi, 0))
    k_spec = pl.BlockSpec((None, tkv, D), lambda bh, qi, ki: (bh, ki, 0))
    v_spec = pl.BlockSpec((None, tkv, D), lambda bh, qi, ki: (bh, ki, 0))
    out_spec = pl.BlockSpec((None, tq, D), lambda bh, qi, ki: (bh, qi, 0))
    attn_spec = pl.BlockSpec((None, tq, S), lambda bh, qi, ki: (bh, qi, 0))

    in_specs = [q_spec, k_spec, v_spec]
    inputs = [q3, k3, v3]
    if has_mask:
        mask = jnp.asarray(mask)
        while mask.ndim < 4:
            mask = mask[None]
        Bm, Hm = int(mask.shape[0]), int(mask.shape[1])
        assert Bm in (1, B) and Hm in (1, H), "mask must broadcast over (B, H)"
        # Keep (B, H) broadcasting in the index_map (no HBM replication);
        # int8 instead of int32 cuts mask HBM traffic 4x.
        mask_i8 = (mask != 0).astype(jnp.int8)

        def mask_index_map(bh, qi, ki):
            b = (bh // H) if Bm != 1 else 0
            h = (bh % H) if Hm != 1 else 0
            return (b, h, qi, ki)

        in_specs.append(pl.BlockSpec((None, None, tq, tkv), mask_index_map))
        inputs.append(mask_i8)

    kernel = functools.partial(_flash_sdpa_kernel, has_mask=has_mask,
                               tkv=tkv, nkv=nkv)

    vmem_limit = int(min(64 * 1024 * 1024,
                         max(32 * 1024 * 1024,
                             _vmem_bytes(tq, tkv, S, D, itemsize, has_mask)
                             + 4 * 1024 * 1024)))

    out3, attn3 = pl.pallas_call(
        kernel,
        out_shape=(
            jax.ShapeDtypeStruct((BH, S, D), out_dtype),
            jax.ShapeDtypeStruct((BH, S, S), out_dtype),
        ),
        grid_spec=pltpu.PrefetchScalarGridSpec(
            num_scalar_prefetch=0,
            grid=grid,
            in_specs=in_specs,
            out_specs=[out_spec, attn_spec],
            scratch_shapes=[
                pltpu.VMEM((tq, 1), jnp.float32),        # running row max
                pltpu.VMEM((tq, 1), jnp.float32),        # running row sum
                pltpu.VMEM((tq, D), jnp.float32),        # output accumulator
                pltpu.VMEM((nkv, tq, 1), jnp.float32),   # per-KV-tile max
            ],
        ),
        compiler_params=pltpu.CompilerParams(
            dimension_semantics=("parallel", "parallel", "arbitrary"),
            vmem_limit_bytes=vmem_limit),
    )(*inputs)

    out = out3.reshape(B, H, S, D)
    attn = attn3.reshape(B, H, S, S)
    return out, attn


def _reference(q, k, v, mask):
    # HIGHEST precision so the reference is a true f32 ground truth (the
    # default TPU matmul precision is bf16 and was the main source of the
    # previous "mismatch").
    scores = jnp.einsum("bhqd,bhkd->bhqk", q, k,
                        precision=jax.lax.Precision.HIGHEST)
    if mask is not None:
        scores = jnp.where(mask == 0, -1000000000.0, scores)
    attn = jax.nn.softmax(scores, axis=-1)
    out = jnp.einsum("bhqk,bhkd->bhqd", attn, v,
                     precision=jax.lax.Precision.HIGHEST)
    return out, attn


if __name__ == "__main__":
    B, H, S, D = 2, 2, 256, 64
    key = jax.random.PRNGKey(0)
    kq, kk, kv_ = jax.random.split(key, 3)
    # Scale q so logits are O(1): keeps the softmax comparison insensitive to
    # matmul-precision differences between backends (the module itself applies
    # no scaling, matching the PyTorch spec).
    q = jax.random.normal(kq, (B, H, S, D), dtype=jnp.float32) * (D ** -0.5)
    k = jax.random.normal(kk, (B, H, S, D), dtype=jnp.float32)
    v = jax.random.normal(kv_, (B, H, S, D), dtype=jnp.float32)
    # Shared causal mask for all batches/heads, shape (1, 1, S, S): the
    # (B, H) broadcast is handled by the BlockSpec index_map, not in HBM.
    mask = jnp.tril(jnp.ones((S, S), dtype=jnp.int32))[None, None]

    # Small tiles so the multi-block online-softmax path is exercised.
    out, attn = scaled_dot_product_attention(q, k, v, mask, tq=128, tkv=128)
    jax.block_until_ready((out, attn))

    ref_out, ref_attn = _reference(q, k, v, mask)
    assert out.shape == (B, H, S, D) and attn.shape == (B, H, S, S)
    err_out = float(jnp.max(jnp.abs(out - ref_out)))
    err_attn = float(jnp.max(jnp.abs(attn - ref_attn)))
    assert err_out < 1e-2, "out mismatch, max abs err = %f" % err_out
    assert err_attn < 1e-2, "attn mismatch, max abs err = %f" % err_attn

    print("KERNEL_OK")
</pallas_src>

<mosaic_0001>
module attributes {stable_mosaic.version = 11 : i64} {
  func.func @_flash_sdpa_kernel(%arg0: i32, %arg1: i32, %arg2: i32, %arg3: memref<1x128x64xf32, #tpu.memory_space<vmem>>, %arg4: memref<1x128x64xf32, #tpu.memory_space<vmem>>, %arg5: memref<1x128x64xf32, #tpu.memory_space<vmem>>, %arg6: memref<1x1x128x128xi8, #tpu.memory_space<vmem>>, %arg7: memref<1x128x64xf32, #tpu.memory_space<vmem>>, %arg8: memref<1x128x256xf32, #tpu.memory_space<vmem>>, %arg9: memref<128x1xf32, #tpu.memory_space<vmem>>, %arg10: memref<128x1xf32, #tpu.memory_space<vmem>>, %arg11: memref<128x64xf32, #tpu.memory_space<vmem>>, %arg12: memref<2x128x1xf32, #tpu.memory_space<vmem>>) attributes {dimension_semantics = [#tpu.dimension_semantics<parallel>, #tpu.dimension_semantics<parallel>, #tpu.dimension_semantics<arbitrary>], iteration_bounds = array<i64: 4, 2, 2>, scalar_prefetch = 0 : i64, scratch_operands = 4 : i64, tpu.core_type = #tpu.core_type<tc>, window_params = [{transform_indices = @transform_0, window_bounds = array<i64: 1, 128, 64>}, {transform_indices = @transform_1, window_bounds = array<i64: 1, 128, 64>}, {transform_indices = @transform_2, window_bounds = array<i64: 1, 128, 64>}, {transform_indices = @transform_3, window_bounds = array<i64: 1, 1, 128, 128>}, {transform_indices = @transform_4, window_bounds = array<i64: 1, 128, 64>}, {transform_indices = @transform_5, window_bounds = array<i64: 1, 128, 256>}]} {
    %c0_i32 = arith.constant 0 : i32
    %0 = arith.cmpi eq, %arg2, %c0_i32 : i32
    %1 = arith.extui %0 : i1 to i32
    %c0_i32_0 = arith.constant 0 : i32
    %2 = arith.cmpi ne, %1, %c0_i32_0 : i32
    scf.if %2 {
      %cst_34 = arith.constant 0xFF800000 : f32
      %51 = vector.broadcast %cst_34 : f32 to vector<128x1xf32>
      %c0_35 = arith.constant 0 : index
      %c0_36 = arith.constant 0 : index
      %52 = vector.load %arg9[%c0_35, %c0_36] : memref<128x1xf32, #tpu.memory_space<vmem>>, vector<128x1xf32>
      tpu.vector_store %arg9[%c0_35, %c0_36], %51 {strides = array<i32>} : memref<128x1xf32, #tpu.memory_space<vmem>>, vector<128x1xf32>,
      %cst_37 = arith.constant 0.000000e+00 : f32
      %53 = vector.broadcast %cst_37 : f32 to vector<128x1xf32>
      %c0_38 = arith.constant 0 : index
      %c0_39 = arith.constant 0 : index
      %54 = vector.load %arg10[%c0_38, %c0_39] : memref<128x1xf32, #tpu.memory_space<vmem>>, vector<128x1xf32>
      tpu.vector_store %arg10[%c0_38, %c0_39], %53 {strides = array<i32>} : memref<128x1xf32, #tpu.memory_space<vmem>>, vector<128x1xf32>,
      %cst_40 = arith.constant 0.000000e+00 : f32
      %55 = vector.broadcast %cst_40 : f32 to vector<128x64xf32>
      %c0_41 = arith.constant 0 : index
      %c0_42 = arith.constant 0 : index
      %56 = vector.load %arg11[%c0_41, %c0_42] : memref<128x64xf32, #tpu.memory_space<vmem>>, vector<128x64xf32>
      tpu.vector_store %arg11[%c0_41, %c0_42], %55 {strides = array<i32>} : memref<128x64xf32, #tpu.memory_space<vmem>>, vector<128x64xf32>,
    } else {
    }
    %c0 = arith.constant 0 : index
    %c0_1 = arith.constant 0 : index
    %c0_2 = arith.constant 0 : index
    %3 = vector.load %arg3[%c0, %c0_1, %c0_2] : memref<1x128x64xf32, #tpu.memory_space<vmem>>, vector<1x128x64xf32>
    %4 = vector.shape_cast %3 : vector<1x128x64xf32> to vector<128x64xf32>
    %c0_3 = arith.constant 0 : index
    %c0_4 = arith.constant 0 : index
    %c0_5 = arith.constant 0 : index
    %5 = vector.load %arg4[%c0_3, %c0_4, %c0_5] : memref<1x128x64xf32, #tpu.memory_space<vmem>>, vector<1x128x64xf32>
    %6 = vector.shape_cast %5 : vector<1x128x64xf32> to vector<128x64xf32>
    %cst = arith.constant dense<0.000000e+00> : vector<128x128xf32>
    %7 = tpu.matmul %4, %6, %cst {dimension_numbers = #tpu.dot_dimension_numbers<[1], [1], [0], [0], [0, 0, 1, 0], [], []>} : vector<128x64xf32>, vector<128x64xf32>, vector<128x128xf32> -> vector<128x128xf32>
    %c0_6 = arith.constant 0 : index
    %c0_7 = arith.constant 0 : index
    %c0_8 = arith.constant 0 : index
    %c0_9 = arith.constant 0 : index
    %8 = vector.load %arg6[%c0_6, %c0_7, %c0_8, %c0_9] : memref<1x1x128x128xi8, #tpu.memory_space<vmem>>, vector<1x1x128x128xi8>
    %9 = vector.shape_cast %8 : vector<1x1x128x128xi8> to vector<128x128xi8>
    %c0_i8 = arith.constant 0 : i8
    %10 = vector.broadcast %c0_i8 : i8 to vector<128x128xi8>
    %11 = arith.cmpi ne, %9, %10 : vector<128x128xi8>
    %cst_10 = arith.constant -1.000000e+09 : f32
    %12 = vector.broadcast %cst_10 : f32 to vector<128x128xf32>
    %13 = arith.select %11, %7, %12 : vector<128x128xi1>, vector<128x128xf32>
    %c0_11 = arith.constant 0 : index
    %c0_12 = arith.constant 0 : index
    %14 = vector.load %arg9[%c0_11, %c0_12] : memref<128x1xf32, #tpu.memory_space<vmem>>, vector<128x1xf32>
    %cst_13 = arith.constant dense<0xFF800000> : vector<128xf32>
    %15 = vector.multi_reduction <maximumf>, %13, %cst_13 [1] : vector<128x128xf32> to vector<128xf32>
    %16 = vector.shape_cast %15 : vector<128xf32> to vector<128x1xf32>
    %17 = arith.maximumf %14, %16 : vector<128x1xf32>
    %18 = arith.subf %14, %17 : vector<128x1xf32>
    %19 = math.exp %18 : vector<128x1xf32>
    %20 = vector.broadcast %17 : vector<128x1xf32> to vector<128x128xf32>
    %21 = arith.subf %13, %20 : vector<128x128xf32>
    %22 = math.exp %21 : vector<128x128xf32>
    %c128_i32 = arith.constant 128 : i32
    %23 = arith.muli %arg2, %c128_i32 : i32
    %24 = tpu.assume_multiple %23, 128 : i32
    %c0_14 = arith.constant 0 : index
    %c0_15 = arith.constant 0 : index
    %25 = arith.index_cast %24 : i32 to index
    %26 = vector.load %arg8[%c0_14, %c0_15, %25] : memref<1x128x256xf32, #tpu.memory_space<vmem>>, vector<1x128x128xf32>
    %27 = vector.shape_cast %26 : vector<1x128x128xf32> to vector<128x128xf32>
    %28 = vector.shape_cast %22 : vector<128x128xf32> to vector<1x128x128xf32>
    tpu.vector_store %arg8[%c0_14, %c0_15, %25], %28 {strides = array<i32>} : memref<1x128x256xf32, #tpu.memory_space<vmem>>, vector<1x128x128xf32>,
    %29 = arith.index_cast %arg2 : i32 to index
    %c0_16 = arith.constant 0 : index
    %c0_17 = arith.constant 0 : index
    %30 = vector.load %arg12[%29, %c0_16, %c0_17] : memref<2x128x1xf32, #tpu.memory_space<vmem>>, vector<1x128x1xf32>
    %31 = vector.shape_cast %30 : vector<1x128x1xf32> to vector<128x1xf32>
    %32 = vector.shape_cast %17 : vector<128x1xf32> to vector<1x128x1xf32>
    tpu.vector_store %arg12[%29, %c0_16, %c0_17], %32 {strides = array<i32>} : memref<2x128x1xf32, #tpu.memory_space<vmem>>, vector<1x128x1xf32>,
    %c0_18 = arith.constant 0 : index
    %c0_19 = arith.constant 0 : index
    %33 = vector.load %arg10[%c0_18, %c0_19] : memref<128x1xf32, #tpu.memory_space<vmem>>, vector<128x1xf32>
    %34 = arith.mulf %19, %33 : vector<128x1xf32>
    %cst_20 = arith.constant dense<0.000000e+00> : vector<128xf32>
    %35 = vector.multi_reduction <add>, %22, %cst_20 [1] : vector<128x128xf32> to vector<128xf32>
    %36 = vector.shape_cast %35 : vector<128xf32> to vector<128x1xf32>
    %37 = arith.addf %34, %36 : vector<128x1xf32>
    %c0_21 = arith.constant 0 : index
    %c0_22 = arith.constant 0 : index
    %38 = vector.load %arg10[%c0_21, %c0_22] : memref<128x1xf32, #tpu.memory_space<vmem>>, vector<128x1xf32>
    tpu.vector_store %arg10[%c0_21, %c0_22], %37 {strides = array<i32>} : memref<128x1xf32, #tpu.memory_space<vmem>>, vector<128x1xf32>,
    %c0_23 = arith.constant 0 : index
    %c0_24 = arith.constant 0 : index
    %39 = vector.load %arg11[%c0_23, %c0_24] : memref<128x64xf32, #tpu.memory_space<vmem>>, vector<128x64xf32>
    %40 = vector.broadcast %19 : vector<128x1xf32> to vector<128x64xf32>
    %41 = arith.mulf %40, %39 : vector<128x64xf32>
    %c0_25 = arith.constant 0 : index
    %c0_26 = arith.constant 0 : index
    %c0_27 = arith.constant 0 : index
    %42 = vector.load %arg5[%c0_25, %c0_26, %c0_27] : memref<1x128x64xf32, #tpu.memory_space<vmem>>, vector<1x128x64xf32>
    %43 = vector.shape_cast %42 : vector<1x128x64xf32> to vector<128x64xf32>
    %cst_28 = arith.constant dense<0.000000e+00> : vector<128x64xf32>
    %44 = tpu.matmul %22, %43, %cst_28 {dimension_numbers = #tpu.dot_dimension_numbers<[1], [0], [0], [1], [0, 0, 1, 1], [], []>} : vector<128x128xf32>, vector<128x64xf32>, vector<128x64xf32> -> vector<128x64xf32>
    %45 = arith.addf %41, %44 : vector<128x64xf32>
    %c0_29 = arith.constant 0 : index
    %c0_30 = arith.constant 0 : index
    %46 = vector.load %arg11[%c0_29, %c0_30] : memref<128x64xf32, #tpu.memory_space<vmem>>, vector<128x64xf32>
    tpu.vector_store %arg11[%c0_29, %c0_30], %45 {strides = array<i32>} : memref<128x64xf32, #tpu.memory_space<vmem>>, vector<128x64xf32>,
    %c0_31 = arith.constant 0 : index
    %c0_32 = arith.constant 0 : index
    %47 = vector.load %arg9[%c0_31, %c0_32] : memref<128x1xf32, #tpu.memory_space<vmem>>, vector<128x1xf32>
    tpu.vector_store %arg9[%c0_31, %c0_32], %17 {strides = array<i32>} : memref<128x1xf32, #tpu.memory_space<vmem>>, vector<128x1xf32>,
    %c1_i32 = arith.constant 1 : i32
    %48 = arith.cmpi eq, %arg2, %c1_i32 : i32
    %49 = arith.extui %48 : i1 to i32
    %c0_i32_33 = arith.constant 0 : i32
    %50 = arith.cmpi ne, %49, %c0_i32_33 : i32
    scf.if %50 {
      %c0_34 = arith.constant 0 : index
      %c0_35 = arith.constant 0 : index
      %51 = vector.load %arg10[%c0_34, %c0_35] : memref<128x1xf32, #tpu.memory_space<vmem>>, vector<128x1xf32>
      %cst_36 = arith.constant 1.000000e+00 : f32
      %52 = vector.broadcast %cst_36 : f32 to vector<128x1xf32>
      %53 = arith.divf %52, %51 : vector<128x1xf32>
      %c0_37 = arith.constant 0 : index
      %c0_38 = arith.constant 0 : index
      %54 = vector.load %arg9[%c0_37, %c0_38] : memref<128x1xf32, #tpu.memory_space<vmem>>, vector<128x1xf32>
      %c0_39 = arith.constant 0 : index
      %c0_40 = arith.constant 0 : index
      %55 = vector.load %arg11[%c0_39, %c0_40] : memref<128x64xf32, #tpu.memory_space<vmem>>, vector<128x64xf32>
      %56 = vector.broadcast %53 : vector<128x1xf32> to vector<128x64xf32>
      %57 = arith.mulf %55, %56 : vector<128x64xf32>
      %c0_41 = arith.constant 0 : index
      %c0_42 = arith.constant 0 : index
      %c0_43 = arith.constant 0 : index
      %58 = vector.load %arg7[%c0_41, %c0_42, %c0_43] : memref<1x128x64xf32, #tpu.memory_space<vmem>>, vector<1x128x64xf32>
      %59 = vector.shape_cast %58 : vector<1x128x64xf32> to vector<128x64xf32>
      %60 = vector.shape_cast %57 : vector<128x64xf32> to vector<1x128x64xf32>
      tpu.vector_store %arg7[%c0_41, %c0_42, %c0_43], %60 {strides = array<i32>} : memref<1x128x64xf32, #tpu.memory_space<vmem>>, vector<1x128x64xf32>,
      %c0_44 = arith.constant 0 : index
      %c0_45 = arith.constant 0 : index
      %c0_46 = arith.constant 0 : index
      %61 = vector.load %arg12[%c0_44, %c0_45, %c0_46] : memref<2x128x1xf32, #tpu.memory_space<vmem>>, vector<1x128x1xf32>
      %62 = vector.shape_cast %61 : vector<1x128x1xf32> to vector<128x1xf32>
      %63 = arith.subf %62, %54 : vector<128x1xf32>
      %64 = math.exp %63 : vector<128x1xf32>
      %65 = arith.mulf %64, %53 : vector<128x1xf32>
      %c0_47 = arith.constant 0 : index
      %c0_48 = arith.constant 0 : index
      %c0_49 = arith.constant 0 : index
      %66 = vector.load %arg8[%c0_47, %c0_48, %c0_49] : memref<1x128x256xf32, #tpu.memory_space<vmem>>, vector<1x128x128xf32>
      %67 = vector.shape_cast %66 : vector<1x128x128xf32> to vector<128x128xf32>
      %68 = vector.broadcast %65 : vector<128x1xf32> to vector<128x128xf32>
      %69 = arith.mulf %67, %68 : vector<128x128xf32>
      %c0_50 = arith.constant 0 : index
      %c0_51 = arith.constant 0 : index
      %c0_52 = arith.constant 0 : index
      %70 = vector.load %arg8[%c0_50, %c0_51, %c0_52] : memref<1x128x256xf32, #tpu.memory_space<vmem>>, vector<1x128x128xf32>
      %71 = vector.shape_cast %70 : vector<1x128x128xf32> to vector<128x128xf32>
      %72 = vector.shape_cast %69 : vector<128x128xf32> to vector<1x128x128xf32>
      tpu.vector_store %arg8[%c0_50, %c0_51, %c0_52], %72 {strides = array<i32>} : memref<1x128x256xf32, #tpu.memory_space<vmem>>, vector<1x128x128xf32>,
      %c1 = arith.constant 1 : index
      %c0_53 = arith.constant 0 : index
      %c0_54 = arith.constant 0 : index
      %73 = vector.load %arg12[%c1, %c0_53, %c0_54] : memref<2x128x1xf32, #tpu.memory_space<vmem>>, vector<1x128x1xf32>
      %74 = vector.shape_cast %73 : vector<1x128x1xf32> to vector<128x1xf32>
      %75 = arith.subf %74, %54 : vector<128x1xf32>
      %76 = math.exp %75 : vector<128x1xf32>
      %77 = arith.mulf %76, %53 : vector<128x1xf32>
      %c0_55 = arith.constant 0 : index
      %c0_56 = arith.constant 0 : index
      %c128 = arith.constant 128 : index
      %78 = vector.load %arg8[%c0_55, %c0_56, %c128] : memref<1x128x256xf32, #tpu.memory_space<vmem>>, vector<1x128x128xf32>
      %79 = vector.shape_cast %78 : vector<1x128x128xf32> to vector<128x128xf32>
      %80 = vector.broadcast %77 : vector<128x1xf32> to vector<128x128xf32>
      %81 = arith.mulf %79, %80 : vector<128x128xf32>
      %c0_57 = arith.constant 0 : index
      %c0_58 = arith.constant 0 : index
      %c128_59 = arith.constant 128 : index
      %82 = vector.load %arg8[%c0_57, %c0_58, %c128_59] : memref<1x128x256xf32, #tpu.memory_space<vmem>>, vector<1x128x128xf32>
      %83 = vector.shape_cast %82 : vector<1x128x128xf32> to vector<128x128xf32>
      %84 = vector.shape_cast %81 : vector<128x128xf32> to vector<1x128x128xf32>
      tpu.vector_store %arg8[%c0_57, %c0_58, %c128_59], %84 {strides = array<i32>} : memref<1x128x256xf32, #tpu.memory_space<vmem>>, vector<1x128x128xf32>,
    } else {
    }
    return
  }
  func.func @transform_0(%arg0: i32, %arg1: i32, %arg2: i32) -> (i32, i32, i32) {
    %c0_i32 = arith.constant 0 : i32
    %c0_i32_0 = arith.constant 0 : i32
    return %arg0, %arg1, %c0_i32 : i32, i32, i32
  }
  func.func @transform_1(%arg0: i32, %arg1: i32, %arg2: i32) -> (i32, i32, i32) {
    %c0_i32 = arith.constant 0 : i32
    %c0_i32_0 = arith.constant 0 : i32
    return %arg0, %arg2, %c0_i32 : i32, i32, i32
  }
  func.func @transform_2(%arg0: i32, %arg1: i32, %arg2: i32) -> (i32, i32, i32) {
    %c0_i32 = arith.constant 0 : i32
    %c0_i32_0 = arith.constant 0 : i32
    return %arg0, %arg2, %c0_i32 : i32, i32, i32
  }
  func.func @transform_3(%arg0: i32, %arg1: i32, %arg2: i32) -> (i32, i32, i32, i32) {
    %c0_i32 = arith.constant 0 : i32
    %c0_i32_0 = arith.constant 0 : i32
    %c0_i32_1 = arith.constant 0 : i32
    return %c0_i32, %c0_i32_0, %arg1, %arg2 : i32, i32, i32, i32
  }
  func.func @transform_4(%arg0: i32, %arg1: i32, %arg2: i32) -> (i32, i32, i32) {
    %c0_i32 = arith.constant 0 : i32
    %c0_i32_0 = arith.constant 0 : i32
    return %arg0, %arg1, %c0_i32 : i32, i32, i32
  }
  func.func @transform_5(%arg0: i32, %arg1: i32, %arg2: i32) -> (i32, i32, i32) {
    %c0_i32 = arith.constant 0 : i32
    %c0_i32_0 = arith.constant 0 : i32
    return %arg0, %arg1, %c0_i32 : i32, i32, i32
  }
}

</mosaic_0001>

<llo_original>
// kernel: tpu_custom_call.1
$region0: #{tpu_custom_call.1}
  #allocation0 [shape = 'u32[]', space=smem, size = 0x4, offset = 0x4, fixed_abs, tag = 'smem constant byte address 0x4 - core index']
  #allocation1 [shape = 'u32[144,128]{1,0:T(1,128)}', space=vmem, size = 0x12000, scoped, tag = 'internal scratch']
  #allocation2 [shape = 'f32[128,1]{1,0:T(8,128)}', space=vmem, size = 0x10000, scoped, tag = 'scratch operand']
  #allocation3 [shape = 'f32[128,1]{1,0:T(8,128)}', space=vmem, size = 0x10000, scoped, tag = 'scratch operand']
  #allocation4 [shape = 'f32[128,64]{1,0:T(8,128)}', space=vmem, size = 0x10000, scoped, tag = 'scratch operand']
  #allocation5 [shape = 'f32[2,128,1]{2,1,0:T(8,128)}', space=vmem, size = 0x20000, scoped, tag = 'scratch operand']
  %s0 = inlined_call_operand.vmem [shape: f32[4,256,64], index: 0, kind: input, shape index: {}]
  %s1 = inlined_call_operand.vmem [shape: f32[4,256,64], index: 1, kind: input, shape index: {}]
  %s2 = inlined_call_operand.vmem [shape: f32[4,256,64], index: 2, kind: input, shape index: {}]
  %s3 = inlined_call_operand.vmem [shape: s8[1,1,256,256], index: 3, kind: input, shape index: {}]
  %s4 = inlined_call_operand.vmem [shape: f32[4,256,64], index: 4, kind: output, shape index: {0}]
  %s5 = inlined_call_operand.hbm [shape: f32[4,256,256], index: 5, kind: output, shape index: {1}]
  %6 = xla_tuple %s4, %s5
  %s7 = sld [smem:[#allocation0]]
  $region103: #{tpu_custom_call.1} parent=0
    _
  %s9 = ssub.s32 1, %s7
  %s10 = scalar_select 0, %s9, %s7
  $region1: #{tpu_custom_call.1} parent=0
    #allocation6 [shape = 'u8[32768]{0}', space=vmem, size = 0x8000, scoped, tag = 'input window, operand 3']
    #allocation7 [shape = 'u8[262144]{0}', space=vmem, size = 0x40000, scoped, tag = 'output window, operand 1']
    #allocation8 [shape = 's32[2]{0}', space=sflag, size = 0x8, scoped, tag = 'scoped memory for tpu_custom_call.1']
    %11 = vsyncpa [#allocation8], 0
    %s12 = scalar_lea.sflag [#allocation8], 1
    %13 = vsyncpa %s12, 0
    loop: start=0, step=1, limit=18
    $region2: #{tpu_custom_call.1} parent=1 // loop_pre_header
      _
    $region3: #{tpu_custom_call.1} parent=1 // loop_header
      %s15 = sphi 0, %s19
      %p16 = scmp.ge.s32.totalorder %s15, 18
      %s22 = sphi 0, %s41
      %s23 = sphi 0, %s37
      %s24 = sphi 0, %s33
      %s25 = sphi 0, %s22
      %s26 = sphi 0, %s23
      %s27 = sphi 0, %s24
      %s28 = sphi 0, %s25
      %s29 = sphi 0, %s26
      %s30 = sphi 0, %s27
      %s46 = sphi 0, %s48
      %s49 = sphi 0, %s46
      %s50 = sphi 0, %s49
      %s66 = sphi 0, %s50
      %s74 = sphi 0, %s76
      %s77 = sphi 0, %s74
      %s78 = sphi 0, %s77
      %s94 = sphi 0, %s78
      %s102 = sphi 0, %s104
      %s105 = sphi 0, %s102
      %s106 = sphi 0, %s105
      %s122 = sphi 0, %s106
      %s130 = sphi 0, %s132
      %s133 = sphi 0, %s130
      %s134 = sphi 0, %s133
      %s150 = sphi 0, %s134
      %s158 = sphi 0, %s160
      %s161 = sphi 0, %s158
      %s162 = sphi 0, %s161
      %s178 = sphi 0, %s162
      %s186 = sphi 0, %s188
      %s189 = sphi 0, %s186
      %s190 = sphi 0, %s189
      %s206 = sphi 0, %s190
    $region4: #{tpu_custom_call.1} parent=1 // loop_header_branch
      %18 = sbr.rel (%p16) target = $region8
    $region5: #{tpu_custom_call.1} parent=1 // loop_body
      %s20 = ssub.s32 %s15, 1
      %s21 = ssub.s32 %s15, 2
      %s31 = sadd.s32 1, %s24
      %p32 = scmp.ge.s32.totalorder %s31, 2
      %s33 = scalar_select %p32, 0, %s31
      %s34 = sadd.s32 1, %s23
      %s35 = scalar_select %p32, %s34, %s23
      %p36 = scmp.ge.s32.totalorder %s35, 2
      %s37 = scalar_select %p36, 0, %s35
      %s38 = sadd.s32 1, %s22
      %s39 = scalar_select %p36, %s38, %s22
      %p40 = scmp.ge.s32.totalorder %s39, 4
      %s41 = scalar_select %p40, 0, %s39
      %s42 = ssub.s32 %s22, %s41
      %s43 = ssub.s32 %s23, %s37
      %s44 = sor.u32 %s42, %s43
      %p45 = scmp.eq.s32.totalorder %s44, 0
      %s47 = sadd.s32 %s46, 1
      %s48 = scalar_select %p45, %s46, %s47
      %p51 = pneg %p45
      %p52 = scmp.eq.s32.totalorder %s15, 15
      %p53 = por %p51, %p52
      %p54 = scmp.ne.s32.totalorder %s46, %s49
      %p55 = scmp.eq.s32.totalorder %s15, 0
      %p56 = por %p54, %p55
      %p57 = scmp.ne.s32.totalorder %s46, %s49
      %p58 = scmp.eq.s32.totalorder %s20, 15
      %p59 = por %p57, %p58
      %p60 = scmp.ne.s32.totalorder %s49, %s50
      %p61 = scmp.eq.s32.totalorder %s20, 0
      %p62 = por %p60, %p61
      %p63 = scmp.ne.s32.totalorder %s49, %s50
      %p64 = scmp.eq.s32.totalorder %s21, 15
      %p65 = por %p63, %p64
      %p67 = scmp.ne.s32.totalorder %s50, %s66
      %p68 = scmp.eq.s32.totalorder %s21, 0
      %p69 = por %p67, %p68
      %s70 = ssub.s32 %s22, %s41
      %s71 = ssub.s32 %s24, %s33
      %s72 = sor.u32 %s70, %s71
      %p73 = scmp.eq.s32.totalorder %s72, 0
      %s75 = sadd.s32 %s74, 1
      %s76 = scalar_select %p73, %s74, %s75
      %p79 = pneg %p73
      %p80 = scmp.eq.s32.totalorder %s15, 15
      %p81 = por %p79, %p80
      %p82 = scmp.ne.s32.totalorder %s74, %s77
      %p83 = scmp.eq.s32.totalorder %s15, 0
      %p84 = por %p82, %p83
      %p85 = scmp.ne.s32.totalorder %s74, %s77
      %p86 = scmp.eq.s32.totalorder %s20, 15
      %p87 = por %p85, %p86
      %p88 = scmp.ne.s32.totalorder %s77, %s78
      %p89 = scmp.eq.s32.totalorder %s20, 0
      %p90 = por %p88, %p89
      %p91 = scmp.ne.s32.totalorder %s77, %s78
      %p92 = scmp.eq.s32.totalorder %s21, 15
      %p93 = por %p91, %p92
      %p95 = scmp.ne.s32.totalorder %s78, %s94
      %p96 = scmp.eq.s32.totalorder %s21, 0
      %p97 = por %p95, %p96
      %s98 = ssub.s32 %s22, %s41
      %s99 = ssub.s32 %s24, %s33
      %s100 = sor.u32 %s98, %s99
      %p101 = scmp.eq.s32.totalorder %s100, 0
      %s103 = sadd.s32 %s102, 1
      %s104 = scalar_select %p101, %s102, %s103
      %p107 = pneg %p101
      %p108 = scmp.eq.s32.totalorder %s15, 15
      %p109 = por %p107, %p108
      %p110 = scmp.ne.s32.totalorder %s102, %s105
      %p111 = scmp.eq.s32.totalorder %s15, 0
      %p112 = por %p110, %p111
      %p113 = scmp.ne.s32.totalorder %s102, %s105
      %p114 = scmp.eq.s32.totalorder %s20, 15
      %p115 = por %p113, %p114
      %p116 = scmp.ne.s32.totalorder %s105, %s106
      %p117 = scmp.eq.s32.totalorder %s20, 0
      %p118 = por %p116, %p117
      %p119 = scmp.ne.s32.totalorder %s105, %s106
      %p120 = scmp.eq.s32.totalorder %s21, 15
      %p121 = por %p119, %p120
      %p123 = scmp.ne.s32.totalorder %s106, %s122
      %p124 = scmp.eq.s32.totalorder %s21, 0
      %p125 = por %p123, %p124
      %s126 = ssub.s32 %s23, %s37
      %s127 = ssub.s32 %s24, %s33
      %s128 = sor.u32 %s126, %s127
      %p129 = scmp.eq.s32.totalorder %s128, 0
      %s131 = sadd.s32 %s130, 1
      %s132 = scalar_select %p129, %s130, %s131
      %p135 = pneg %p129
      %p136 = scmp.eq.s32.totalorder %s15, 15
      %p137 = por %p135, %p136
      %p138 = scmp.ne.s32.totalorder %s130, %s133
      %p139 = scmp.eq.s32.totalorder %s15, 0
      %p140 = por %p138, %p139
      %p141 = scmp.ne.s32.totalorder %s130, %s133
      %p142 = scmp.eq.s32.totalorder %s20, 15
      %p143 = por %p141, %p142
      %p144 = scmp.ne.s32.totalorder %s133, %s134
      %p145 = scmp.eq.s32.totalorder %s20, 0
      %p146 = por %p144, %p145
      %p147 = scmp.ne.s32.totalorder %s133, %s134
      %p148 = scmp.eq.s32.totalorder %s21, 15
      %p149 = por %p147, %p148
      %p151 = scmp.ne.s32.totalorder %s134, %s150
      %p152 = scmp.eq.s32.totalorder %s21, 0
      %p153 = por %p151, %p152
      %s154 = ssub.s32 %s22, %s41
      %s155 = ssub.s32 %s23, %s37
      %s156 = sor.u32 %s154, %s155
      %p157 = scmp.eq.s32.totalorder %s156, 0
      %s159 = sadd.s32 %s158, 1
      %s160 = scalar_select %p157, %s158, %s159
      %p163 = pneg %p157
      %p164 = scmp.eq.s32.totalorder %s15, 15
      %p165 = por %p163, %p164
      %p166 = scmp.ne.s32.totalorder %s158, %s161
      %p167 = scmp.eq.s32.totalorder %s15, 0
      %p168 = por %p166, %p167
      %p169 = scmp.ne.s32.totalorder %s158, %s161
      %p170 = scmp.eq.s32.totalorder %s20, 15
      %p171 = por %p169, %p170
      %p172 = scmp.ne.s32.totalorder %s161, %s162
      %p173 = scmp.eq.s32.totalorder %s20, 0
      %p174 = por %p172, %p173
      %p175 = scmp.ne.s32.totalorder %s161, %s162
      %p176 = scmp.eq.s32.totalorder %s21, 15
      %p177 = por %p175, %p176
      %p179 = scmp.ne.s32.totalorder %s162, %s178
      %p180 = scmp.eq.s32.totalorder %s21, 0
      %p181 = por %p179, %p180
      %s182 = ssub.s32 %s22, %s41
      %s183 = ssub.s32 %s23, %s37
      %s184 = sor.u32 %s182, %s183
      %p185 = scmp.eq.s32.totalorder %s184, 0
      %s187 = sadd.s32 %s186, 1
      %s188 = scalar_select %p185, %s186, %s187
      %p191 = pneg %p185
      %p192 = scmp.eq.s32.totalorder %s15, 15
      %p193 = por %p191, %p192
      %p194 = scmp.ne.s32.totalorder %s186, %s189
      %p195 = scmp.eq.s32.totalorder %s15, 0
      %p196 = por %p194, %p195
      %p197 = scmp.ne.s32.totalorder %s186, %s189
      %p198 = scmp.eq.s32.totalorder %s20, 15
      %p199 = por %p197, %p198
      %p200 = scmp.ne.s32.totalorder %s189, %s190
      %p201 = scmp.eq.s32.totalorder %s20, 0
      %p202 = por %p200, %p201
      %p203 = scmp.ne.s32.totalorder %s189, %s190
      %p204 = scmp.eq.s32.totalorder %s21, 15
      %p205 = por %p203, %p204
      %p207 = scmp.ne.s32.totalorder %s190, %s206
      %p208 = scmp.eq.s32.totalorder %s21, 0
      %p209 = por %p207, %p208
      %p210 = scmp.le.s32.totalorder 1, %s15
      %p211 = scmp.lt.s32.totalorder %s15, 17
      %p212 = pnand %p210, %p211
      %p213 = pneg %p212
      // Predicated region
      $region9: #{tpu_custom_call.1} parent=5 // pred_check
        _
      $region10: #{tpu_custom_call.1} parent=5 // pred_check_branch
        %215 = sbr.rel (%p212) target = $region12
      $region11: #{tpu_custom_call.1} parent=5 // pred_region
        %s216 = ssub.s32 %s15, 1
      $region12: #{tpu_custom_call.1} parent=5 // pred_fallthru
        _
      %p217 = scmp.lt.s32.totalorder %s15, 16
      // Predicated region
      $region13: #{tpu_custom_call.1} parent=5 // pred_check
        %p218 = pneg %p217
      $region14: #{tpu_custom_call.1} parent=5 // pred_check_branch
        %220 = sbr.rel (%p218) target = $region16
      $region15: #{tpu_custom_call.1} parent=5 // pred_region
        // Predicated region
        $region17: #{tpu_custom_call.1} parent=15 // pred_check
          %p221 = pneg %p56
        $region18: #{tpu_custom_call.1} parent=15 // pred_check_branch
          %223 = sbr.rel (%p221) target = $region20
        $region19: #{tpu_custom_call.1} parent=15 // pred_region
          %s224 = smul.u32 16, %s23
          %p225 = scmp.lt.s32.totalorder %s22, 3
          %s226 = scalar_select %p225, %s22, 3
          %p227 = scmp.lt.s32.totalorder %s224, 31
          %s228 = scalar_select %p227, %s224, 31
          %s229 = smul.addr %s226, 32
          %s230 = sadd.s32 %s228, %s229
          %s231 = smul.addr %s230, 8
          %s232 = scalar_lea.vmem %s0, %s231
          %s233 = smul.u32 16, %s23
        $region20: #{tpu_custom_call.1} parent=15 // pred_fallthru
          _
        // Predicated region
        $region21: #{tpu_custom_call.1} parent=15 // pred_check
          %p234 = pneg %p84
        $region22: #{tpu_custom_call.1} parent=15 // pred_check_branch
          %236 = sbr.rel (%p234) target = $region24
        $region23: #{tpu_custom_call.1} parent=15 // pred_region
          %s237 = smul.u32 16, %s24
          %p238 = scmp.lt.s32.totalorder %s22, 3
          %s239 = scalar_select %p238, %s22, 3
          %p240 = scmp.lt.s32.totalorder %s237, 31
          %s241 = scalar_select %p240, %s237, 31
          %s242 = smul.addr %s239, 32
          %s243 = sadd.s32 %s241, %s242
          %s244 = smul.addr %s243, 8
          %s245 = scalar_lea.vmem %s1, %s244
          %s246 = smul.u32 16, %s24
        $region24: #{tpu_custom_call.1} parent=15 // pred_fallthru
          _
        // Predicated region
        $region25: #{tpu_custom_call.1} parent=15 // pred_check
          %p247 = pneg %p112
        $region26: #{tpu_custom_call.1} parent=15 // pred_check_branch
          %249 = sbr.rel (%p247) target = $region28
        $region27: #{tpu_custom_call.1} parent=15 // pred_region
          %s250 = smul.u32 16, %s24
          %p251 = scmp.lt.s32.totalorder %s22, 3
          %s252 = scalar_select %p251, %s22, 3
          %p253 = scmp.lt.s32.totalorder %s250, 31
          %s254 = scalar_select %p253, %s250, 31
          %s255 = smul.addr %s252, 32
          %s256 = sadd.s32 %s254, %s255
          %s257 = smul.addr %s256, 8
          %s258 = scalar_lea.vmem %s2, %s257
          %s259 = smul.u32 16, %s24
        $region28: #{tpu_custom_call.1} parent=15 // pred_fallthru
          _
        // Predicated region
        $region29: #{tpu_custom_call.1} parent=15 // pred_check
          %p260 = pneg %p140
        $region30: #{tpu_custom_call.1} parent=15 // pred_check_branch
          %262 = sbr.rel (%p260) target = $region32
        $region31: #{tpu_custom_call.1} parent=15 // pred_region
          %s263 = sand.u32 %s130, 1
          %s264 = sand.u32 %s130, 1
          %s265 = smul.addr %s264, 32
          %s266 = scalar_lea.vmem [#allocation6], %s265
          %s267 = smul.u32 4, %s23
          %s268 = smul.addr %s267, 2
          %s269 = sadd.s32 %s24, %s268
          %s270 = smul.addr %s269, 8
          %s271 = scalar_lea.vmem %s3, %s270
          // Predicated region
          $region33: #{tpu_custom_call.1} parent=31 // pred_check
            _
          $region34: #{tpu_custom_call.1} parent=31 // pred_check_branch
            %273 = sbr.rel (0) target = $region36
          $region35: #{tpu_custom_call.1} parent=31 // pred_region
            // Predicated region
            $region37: #{tpu_custom_call.1} parent=35 // pred_check
              _
            $region38: #{tpu_custom_call.1} parent=35 // pred_check_branch
              %275 = sbr.rel (0) target = $region40
            $region39: #{tpu_custom_call.1} parent=35 // pred_region
              // Predicated region
              $region52: #{tpu_custom_call.1} parent=39 // pred_check
                _
              $region53: #{tpu_custom_call.1} parent=39 // pred_check_branch
                %296 = sbr.rel (0) target = $region55
              $region54: #{tpu_custom_call.1} parent=39 // pred_region
                loop: start=0, step=1, limit=1
                $region56: #{tpu_custom_call.1} parent=54 // loop_pre_header
                  _
                $region57: #{tpu_custom_call.1} parent=54 // loop_header
                  %s298 = sphi 0, %s302
                  %p299 = scmp.ge.s32.totalorder %s298, 1
                  %s303 = sphi %s271, %s271
                  %s304 = sphi %s266, %s266
                $region58: #{tpu_custom_call.1} parent=54 // loop_header_branch
                  %301 = sbr.rel (%p299) target = $region62
                $region59: #{tpu_custom_call.1} parent=54 // loop_body
                  %v305 = vld [vmem:[%s303] sm:$0xff]
                  %306 = vst [vmem:[%s304] sm:$0xff] %v305
                  %v307 = vld [vmem:[%s303 + $0x10] sm:$0xff]
                  %308 = vst [vmem:[%s304 + $0x8] sm:$0xff] %v307
                  %v309 = vld [vmem:[%s303 + $0x20] sm:$0xff]
                  %310 = vst [vmem:[%s304 + $0x10] sm:$0xff] %v309
                  %v311 = vld [vmem:[%s303 + $0x30] sm:$0xff]
                  %312 = vst [vmem:[%s304 + $0x18] sm:$0xff] %v311
                $region60: #{tpu_custom_call.1} parent=54 // loop_footer
                  %s302 = sadd.s32 1, %s298
                $region61: #{tpu_custom_call.1} parent=54 // loop_footer_branch
                  %297 = sbr.rel target = $region57
                $region62: #{tpu_custom_call.1} parent=54 // loop_exit
                  _
              $region55: #{tpu_custom_call.1} parent=39 // pred_fallthru
                _
              // Predicated region
              $region63: #{tpu_custom_call.1} parent=39 // pred_check
                _
              $region64: #{tpu_custom_call.1} parent=39 // pred_check_branch
                %314 = sbr.rel target = $region66
              $region65: #{tpu_custom_call.1} parent=39 // pred_region
                _
              $region66: #{tpu_custom_call.1} parent=39 // pred_fallthru
                _
            $region40: #{tpu_custom_call.1} parent=35 // pred_fallthru
              _
            // Predicated region
            $region41: #{tpu_custom_call.1} parent=35 // pred_check
              _
            $region42: #{tpu_custom_call.1} parent=35 // pred_check_branch
              %277 = sbr.rel target = $region44
            $region43: #{tpu_custom_call.1} parent=35 // pred_region
              loop: start=0, step=1, limit=1
              $region45: #{tpu_custom_call.1} parent=43 // loop_pre_header
                _
              $region46: #{tpu_custom_call.1} parent=43 // loop_header
                %s280 = sphi 0, %s284
                %p281 = scmp.ge.s32.totalorder %s280, 1
                %s285 = sphi %s271, %s271
                %s286 = sphi %s266, %s266
              $region47: #{tpu_custom_call.1} parent=43 // loop_header_branch
                %283 = sbr.rel (%p281) target = $region51
              $region48: #{tpu_custom_call.1} parent=43 // loop_body
                %v287 = vld [vmem:[%s285] sm:$0xff]
                %288 = vst [vmem:[%s286] sm:$0xff] %v287
                %v289 = vld [vmem:[%s285 + $0x10] sm:$0xff]
                %290 = vst [vmem:[%s286 + $0x8] sm:$0xff] %v289
                %v291 = vld [vmem:[%s285 + $0x20] sm:$0xff]
                %292 = vst [vmem:[%s286 + $0x10] sm:$0xff] %v291
                %v293 = vld [vmem:[%s285 + $0x30] sm:$0xff]
                %294 = vst [vmem:[%s286 + $0x18] sm:$0xff] %v293
              $region49: #{tpu_custom_call.1} parent=43 // loop_footer
                %s284 = sadd.s32 1, %s280
              $region50: #{tpu_custom_call.1} parent=43 // loop_footer_branch
                %279 = sbr.rel target = $region46
              $region51: #{tpu_custom_call.1} parent=43 // loop_exit
                _
            $region44: #{tpu_custom_call.1} parent=35 // pred_fallthru
              _
          $region36: #{tpu_custom_call.1} parent=31 // pred_fallthru
            _
          %315 = vnop
        $region32: #{tpu_custom_call.1} parent=15 // pred_fallthru
          _
      $region16: #{tpu_custom_call.1} parent=5 // pred_fallthru
        _
      %p316 = scmp.le.s32.totalorder 1, %s15
      %p317 = scmp.lt.s32.totalorder %s15, 17
      %p318 = pnand %p316, %p317
      %p319 = pneg %p318
      // Predicated region
      $region67: #{tpu_custom_call.1} parent=5 // pred_check
        _
      $region68: #{tpu_custom_call.1} parent=5 // pred_check_branch
        %321 = sbr.rel (%p318) target = $region70
      $region69: #{tpu_custom_call.1} parent=5 // pred_region
        %s322 = ssub.s32 %s15, 1
        %s323 = sand.u32 %s133, 1
        %s324 = sand.u32 %s133, 1
        %s325 = smul.addr %s324, 32
        %s326 = scalar_lea.vmem [#allocation6], %s325
        // Predicated region
        $region71: #{tpu_custom_call.1} parent=69 // pred_check
          %p327 = pneg %p146
        $region72: #{tpu_custom_call.1} parent=69 // pred_check_branch
          %329 = sbr.rel (%p327) target = $region74
        $region73: #{tpu_custom_call.1} parent=69 // pred_region
          _
        $region74: #{tpu_custom_call.1} parent=69 // pred_fallthru
          _
        %s330 = smul.u32 16, %s26
        %p331 = scmp.lt.s32.totalorder %s25, 3
        %s332 = scalar_select %p331, %s25, 3
        %p333 = scmp.lt.s32.totalorder %s330, 31
        %s334 = scalar_select %p333, %s330, 31
        %s335 = smul.addr %s332, 32
        %s336 = sadd.s32 %s334, %s335
        %s337 = smul.addr %s336, 8
        %s338 = scalar_lea.vmem %s0, %s337
        %p339 = pneg %p62
        %p340 = pneg %p59
        %s341 = smul.u32 16, %s27
        %p342 = scmp.lt.s32.totalorder %s25, 3
        %s343 = scalar_select %p342, %s25, 3
        %p344 = scmp.lt.s32.totalorder %s341, 31
        %s345 = scalar_select %p344, %s341, 31
        %s346 = smul.addr %s343, 32
        %s347 = sadd.s32 %s345, %s346
        %s348 = smul.addr %s347, 8
        %s349 = scalar_lea.vmem %s1, %s348
        %p350 = pneg %p90
        %p351 = pneg %p87
        %s352 = smul.u32 16, %s27
        %p353 = scmp.lt.s32.totalorder %s25, 3
        %s354 = scalar_select %p353, %s25, 3
        %p355 = scmp.lt.s32.totalorder %s352, 31
        %s356 = scalar_select %p355, %s352, 31
        %s357 = smul.addr %s354, 32
        %s358 = sadd.s32 %s356, %s357
        %s359 = smul.addr %s358, 8
        %s360 = scalar_lea.vmem %s2, %s359
        %p361 = pneg %p118
        %p362 = pneg %p115
        %s363 = sand.u32 %s133, 1
        %s364 = sand.u32 %s133, 1
        %s365 = smul.addr %s364, 32
        %s366 = scalar_lea.vmem [#allocation6], %s365
        %p367 = pneg %p146
        %p368 = pneg %p143
        %p369 = pneg %p174
        %p370 = pneg %p171
        %s371 = smul.u32 16, %s26
        %p372 = scmp.lt.s32.totalorder %s25, 3
        %s373 = scalar_select %p372, %s25, 3
        %p374 = scmp.lt.s32.totalorder %s371, 31
        %s375 = scalar_select %p374, %s371, 31
        %s376 = smul.addr %s373, 32
        %s377 = sadd.s32 %s375, %s376
        %s378 = smul.addr %s377, 8
        %s379 = scalar_lea.vmem %s4, %s378
        %p380 = pneg %p202
        %p381 = pneg %p199
        %s382 = sand.u32 %s189, 1
        %s383 = scalar_lea.sflag [#allocation8], %s382
        %s384 = sand.u32 %s189, 1
        %s385 = smul.addr %s384, 256
        %s386 = scalar_lea.vmem [#allocation7], %s385
        %s387 = smul.u32 16, %s26
        %p388 = scmp.lt.s32.totalorder %s25, 3
        %s389 = scalar_select %p388, %s25, 3
        %p390 = scmp.lt.s32.totalorder %s387, 31
        %s391 = scalar_select %p390, %s387, 31
        %s392 = smul.addr %s389, 32
        %s393 = sadd.s32 %s391, %s392
        %s394 = smul.addr %s393, 8
        %s395 = scalar_lea.vmem %s0, %s394
        %s396 = smul.u32 16, %s26
        %s397 = smul.u32 16, %s27
        %p398 = scmp.lt.s32.totalorder %s25, 3
        %s399 = scalar_select %p398, %s25, 3
        %p400 = scmp.lt.s32.totalorder %s397, 31
        %s401 = scalar_select %p400, %s397, 31
        %s402 = smul.addr %s399, 32
        %s403 = sadd.s32 %s401, %s402
        %s404 = smul.addr %s403, 8
        %s405 = scalar_lea.vmem %s1, %s404
        %s406 = smul.u32 16, %s27
        %s407 = smul.u32 16, %s27
        %p408 = scmp.lt.s32.totalorder %s25, 3
        %s409 = scalar_select %p408, %s25, 3
        %p410 = scmp.lt.s32.totalorder %s407, 31
        %s411 = scalar_select %p410, %s407, 31
        %s412 = smul.addr %s409, 32
        %s413 = sadd.s32 %s411, %s412
        %s414 = smul.addr %s413, 8
        %s415 = scalar_lea.vmem %s2, %s414
        %s416 = smul.u32 16, %s27
        %s417 = smul.u32 4, %s26
        %s418 = smul.u32 16, %s26
        %p419 = scmp.lt.s32.totalorder %s25, 3
        %s420 = scalar_select %p419, %s25, 3
        %p421 = scmp.lt.s32.totalorder %s418, 31
        %s422 = scalar_select %p421, %s418, 31
        %s423 = smul.addr %s420, 32
        %s424 = sadd.s32 %s422, %s423
        %s425 = smul.addr %s424, 8
        %s426 = scalar_lea.vmem %s4, %s425
        %s427 = smul.u32 16, %s26
        %s428 = smul.u32 16, %s26
        %p431 = scmp.eq.s32.totalorder %s27, 0
        // Predicated region
        $region75: #{tpu_custom_call.1} parent=69 // pred_check
          %p432 = pneg %p431
        $region76: #{tpu_custom_call.1} parent=69 // pred_check_branch
          %434 = sbr.rel (%p432) target = $region78
        $region77: #{tpu_custom_call.1} parent=69 // pred_region
          %vm435 = vcmask 7168
          %436 = vst.msk [vmem:[#allocation2] sm:$0xff] %vm435, -inf
          %437 = vst.msk [vmem:[#allocation2 + $0x8] sm:$0xff] %vm435, -inf
          %438 = vst.msk [vmem:[#allocation2 + $0x10] sm:$0xff] %vm435, -inf
          %439 = vst.msk [vmem:[#allocation2 + $0x18] sm:$0xff] %vm435, -inf
          %440 = vst.msk [vmem:[#allocation2 + $0x20] sm:$0xff] %vm435, -inf
          %441 = vst.msk [vmem:[#allocation2 + $0x28] sm:$0xff] %vm435, -inf
          %442 = vst.msk [vmem:[#allocation2 + $0x30] sm:$0xff] %vm435, -inf
          %443 = vst.msk [vmem:[#allocation2 + $0x38] sm:$0xff] %vm435, -inf
          %444 = vst.msk [vmem:[#allocation2 + $0x40] sm:$0xff] %vm435, -inf
          %445 = vst.msk [vmem:[#allocation2 + $0x48] sm:$0xff] %vm435, -inf
          %446 = vst.msk [vmem:[#allocation2 + $0x50] sm:$0xff] %vm435, -inf
          %447 = vst.msk [vmem:[#allocation2 + $0x58] sm:$0xff] %vm435, -inf
          %448 = vst.msk [vmem:[#allocation2 + $0x60] sm:$0xff] %vm435, -inf
          %449 = vst.msk [vmem:[#allocation2 + $0x68] sm:$0xff] %vm435, -inf
          %450 = vst.msk [vmem:[#allocation2 + $0x70] sm:$0xff] %vm435, -inf
          %451 = vst.msk [vmem:[#allocation2 + $0x78] sm:$0xff] %vm435, -inf
          %452 = vst.msk [vmem:[#allocation3] sm:$0xff] %vm435, 0.0
          %453 = vst.msk [vmem:[#allocation3 + $0x8] sm:$0xff] %vm435, 0.0
          %454 = vst.msk [vmem:[#allocation3 + $0x10] sm:$0xff] %vm435, 0.0
          %455 = vst.msk [vmem:[#allocation3 + $0x18] sm:$0xff] %vm435, 0.0
          %456 = vst.msk [vmem:[#allocation3 + $0x20] sm:$0xff] %vm435, 0.0
          %457 = vst.msk [vmem:[#allocation3 + $0x28] sm:$0xff] %vm435, 0.0
          %458 = vst.msk [vmem:[#allocation3 + $0x30] sm:$0xff] %vm435, 0.0
          %459 = vst.msk [vmem:[#allocation3 + $0x38] sm:$0xff] %vm435, 0.0
          %460 = vst.msk [vmem:[#allocation3 + $0x40] sm:$0xff] %vm435, 0.0
          %461 = vst.msk [vmem:[#allocation3 + $0x48] sm:$0xff] %vm435, 0.0
          %462 = vst.msk [vmem:[#allocation3 + $0x50] sm:$0xff] %vm435, 0.0
          %463 = vst.msk [vmem:[#allocation3 + $0x58] sm:$0xff] %vm435, 0.0
          %464 = vst.msk [vmem:[#allocation3 + $0x60] sm:$0xff] %vm435, 0.0
          %465 = vst.msk [vmem:[#allocation3 + $0x68] sm:$0xff] %vm435, 0.0
          %466 = vst.msk [vmem:[#allocation3 + $0x70] sm:$0xff] %vm435, 0.0
          %467 = vst.msk [vmem:[#allocation3 + $0x78] sm:$0xff] %vm435, 0.0
          %vm468 = vcmask 523264
          %469 = vst.msk [vmem:[#allocation4] sm:$0xff] %vm468, 0.0
          %470 = vst.msk [vmem:[#allocation4 + $0x8] sm:$0xff] %vm468, 0.0
          %471 = vst.msk [vmem:[#allocation4 + $0x10] sm:$0xff] %vm468, 0.0
          %472 = vst.msk [vmem:[#allocation4 + $0x18] sm:$0xff] %vm468, 0.0
          %473 = vst.msk [vmem:[#allocation4 + $0x20] sm:$0xff] %vm468, 0.0
          %474 = vst.msk [vmem:[#allocation4 + $0x28] sm:$0xff] %vm468, 0.0
          %475 = vst.msk [vmem:[#allocation4 + $0x30] sm:$0xff] %vm468, 0.0
          %476 = vst.msk [vmem:[#allocation4 + $0x38] sm:$0xff] %vm468, 0.0
          %477 = vst.msk [vmem:[#allocation4 + $0x40] sm:$0xff] %vm468, 0.0
          %478 = vst.msk [vmem:[#allocation4 + $0x48] sm:$0xff] %vm468, 0.0
          %479 = vst.msk [vmem:[#allocation4 + $0x50] sm:$0xff] %vm468, 0.0
          %480 = vst.msk [vmem:[#allocation4 + $0x58] sm:$0xff] %vm468, 0.0
          %481 = vst.msk [vmem:[#allocation4 + $0x60] sm:$0xff] %vm468, 0.0
          %482 = vst.msk [vmem:[#allocation4 + $0x68] sm:$0xff] %vm468, 0.0
          %483 = vst.msk [vmem:[#allocation4 + $0x70] sm:$0xff] %vm468, 0.0
          %484 = vst.msk [vmem:[#allocation4 + $0x78] sm:$0xff] %vm468, 0.0
        $region78: #{tpu_custom_call.1} parent=69 // pred_fallthru
          _
        %v485 = vld [vmem:[%s395] sm:$0xff]
        %v486 = vld [vmem:[%s395 + $0x8] sm:$0xff]
        %v487 = vld [vmem:[%s395 + $0x10] sm:$0xff]
        %v488 = vld [vmem:[%s395 + $0x18] sm:$0xff]
        %v489 = vld [vmem:[%s395 + $0x20] sm:$0xff]
        %v490 = vld [vmem:[%s395 + $0x28] sm:$0xff]
        %v491 = vld [vmem:[%s395 + $0x30] sm:$0xff]
        %v492 = vld [vmem:[%s395 + $0x38] sm:$0xff]
        %v493 = vld [vmem:[%s395 + $0x40] sm:$0xff]
        %v494 = vld [vmem:[%s395 + $0x48] sm:$0xff]
        %v495 = vld [vmem:[%s395 + $0x50] sm:$0xff]
        %v496 = vld [vmem:[%s395 + $0x58] sm:$0xff]
        %v497 = vld [vmem:[%s395 + $0x60] sm:$0xff]
        %v498 = vld [vmem:[%s395 + $0x68] sm:$0xff]
        %v499 = vld [vmem:[%s395 + $0x70] sm:$0xff]
        %v500 = vld [vmem:[%s395 + $0x78] sm:$0xff]
        %v501 = vld [vmem:[%s405] sm:$0xff]
        %v502 = vld [vmem:[%s405 + $0x8] sm:$0xff]
        %v503 = vld [vmem:[%s405 + $0x10] sm:$0xff]
        %v504 = vld [vmem:[%s405 + $0x18] sm:$0xff]
        %v505 = vld [vmem:[%s405 + $0x20] sm:$0xff]
        %v506 = vld [vmem:[%s405 + $0x28] sm:$0xff]
        %v507 = vld [vmem:[%s405 + $0x30] sm:$0xff]
        %v508 = vld [vmem:[%s405 + $0x38] sm:$0xff]
        %v509 = vld [vmem:[%s405 + $0x40] sm:$0xff]
        %v510 = vld [vmem:[%s405 + $0x48] sm:$0xff]
        %v511 = vld [vmem:[%s405 + $0x50] sm:$0xff]
        %v512 = vld [vmem:[%s405 + $0x58] sm:$0xff]
        %v513 = vld [vmem:[%s405 + $0x60] sm:$0xff]
        %v514 = vld [vmem:[%s405 + $0x68] sm:$0xff]
        %v515 = vld [vmem:[%s405 + $0x70] sm:$0xff]
        %v516 = vld [vmem:[%s405 + $0x78] sm:$0xff]
        %vm517 = vcmask 523264
        %v519 = vsel %vm517, %v485, 0
        %v522 = vsel %vm517, %v486, 0
        %v525 = vsel %vm517, %v487, 0
        %v528 = vsel %vm517, %v488, 0
        %v531 = vsel %vm517, %v489, 0
        %v534 = vsel %vm517, %v490, 0
        %v537 = vsel %vm517, %v491, 0
        %v540 = vsel %vm517, %v492, 0
        %v543 = vsel %vm517, %v493, 0
        %v546 = vsel %vm517, %v494, 0
        %v549 = vsel %vm517, %v495, 0
        %v552 = vsel %vm517, %v496, 0
        %v555 = vsel %vm517, %v497, 0
        %v558 = vsel %vm517, %v498, 0
        %v561 = vsel %vm517, %v499, 0
        %v564 = vsel %vm517, %v500, 0
        %v567 = vsel %vm517, %v501, 0
        %v570 = vsel %vm517, %v502, 0
        %v573 = vsel %vm517, %v503, 0
        %v576 = vsel %vm517, %v504, 0
        %v579 = vsel %vm517, %v505, 0
        %v582 = vsel %vm517, %v506, 0
        %v585 = vsel %vm517, %v507, 0
        %v588 = vsel %vm517, %v508, 0
        %v591 = vsel %vm517, %v509, 0
        %v594 = vsel %vm517, %v510, 0
        %v597 = vsel %vm517, %v511, 0
        %v600 = vsel %vm517, %v512, 0
        %v603 = vsel %vm517, %v513, 0
        %v606 = vsel %vm517, %v514, 0
        %v609 = vsel %vm517, %v515, 0
        %v612 = vsel %vm517, %v516, 0
        %614 = vmatprep.subr.mxu0 0.0
        %615 = vmatpush1.xpose.msra.mxu0 %v567
        %616 = vmatprep.subr.mxu0 0.0
        %617 = vmatpush1.xpose.msra.mxu0 %v570
        %618 = vmatprep.subr.mxu0 0.0
        %619 = vmatpush1.xpose.msra.mxu0 %v573
        %620 = vmatprep.subr.mxu0 0.0
        %621 = vmatpush1.xpose.msra.mxu0 %v576
        %622 = vmatprep.subr.mxu0 0.0
        %623 = vmatpush1.xpose.msra.mxu0 %v579
        %624 = vmatprep.subr.mxu0 0.0
        %625 = vmatpush1.xpose.msra.mxu0 %v582
        %626 = vmatprep.subr.mxu0 0.0
        %627 = vmatpush1.xpose.msra.mxu0 %v585
        %628 = vmatprep.subr.mxu0 0.0
        %629 = vmatpush1.xpose.msra.mxu0 %v588
        %630 = vmatprep.subr.mxu0 0.0
        %631 = vmatpush1.xpose.msra.mxu0 %v591
        %632 = vmatprep.subr.mxu0 0.0
        %633 = vmatpush1.xpose.msra.mxu0 %v594
        %634 = vmatprep.subr.mxu0 0.0
        %635 = vmatpush1.xpose.msra.mxu0 %v597
        %636 = vmatprep.subr.mxu0 0.0
        %637 = vmatpush1.xpose.msra.mxu0 %v600
        %638 = vmatprep.subr.mxu0 0.0
        %639 = vmatpush1.xpose.msra.mxu0 %v603
        %640 = vmatprep.subr.mxu0 0.0
        %641 = vmatpush1.xpose.msra.mxu0 %v606
        %642 = vmatprep.subr.mxu0 0.0
        %643 = vmatpush1.xpose.msra.mxu0 %v609
        %644 = vmatprep.subr.mxu0 0.0
        %645 = vmatpush1.xpose.msra.mxu0 %v612
        %646 = vmatprep.subr.mxu0 0.0
        %647 = vmatpush1.xpose.msra.mxu0 0.0
        %648 = vmatprep.subr.mxu0 0.0
        %649 = vmatpush1.xpose.msra.mxu0 0.0
        %650 = vmatprep.subr.mxu0 0.0
        %651 = vmatpush1.xpose.msra.mxu0 0.0
        %652 = vmatprep.subr.mxu0 0.0
        %653 = vmatpush1.xpose.msra.mxu0 0.0
        %654 = vmatprep.subr.mxu0 0.0
        %655 = vmatpush1.xpose.msra.mxu0 0.0
        %656 = vmatprep.subr.mxu0 0.0
        %657 = vmatpush1.xpose.msra.mxu0 0.0
        %658 = vmatprep.subr.mxu0 0.0
        %659 = vmatpush1.xpose.msra.mxu0 0.0
        %660 = vmatprep.subr.mxu0 0.0
        %661 = vmatpush1.xpose.msra.mxu0 0.0
        %662 = vmatprep.subr.mxu0 0.0
        %663 = vmatpush1.xpose.msra.mxu0 0.0
        %664 = vmatprep.subr.mxu0 0.0
        %665 = vmatpush1.xpose.msra.mxu0 0.0
        %666 = vmatprep.subr.mxu0 0.0
        %667 = vmatpush1.xpose.msra.mxu0 0.0
        %668 = vmatprep.subr.mxu0 0.0
        %669 = vmatpush1.xpose.msra.mxu0 0.0
        %670 = vmatprep.subr.mxu0 0.0
        %671 = vmatpush1.xpose.msra.mxu0 0.0
        %672 = vmatprep.subr.mxu0 0.0
        %673 = vmatpush1.xpose.msra.mxu0 0.0
        %674 = vmatprep.subr.mxu0 0.0
        %675 = vmatpush1.xpose.msra.mxu0 0.0
        %676 = vmatprep.subr.mxu0 0.0
        %677 = vmatpush1.xpose.msra.mxu0 0.0
        %678 = vmatprep.mubr.f32.mxu0 0.0
        %679 = vmatmul.mubr.f32.gmra.mrb[0].mxu0 %v519
        %v680 = vpop.f32.mrb[0].mxu0
        %v681 = vadd.f32 0.0, %v680
        %v682 = vpop.f32.mrb[0].mxu0
        %683 = vmatprep.mubr.f32.mxu0 0.0
        %684 = vmatmul.mubr.f32.gmra.mrb[0].mxu0 %v522
        %v685 = vpop.f32.mrb[0].mxu0
        %v686 = vadd.f32 0.0, %v685
        %v687 = vpop.f32.mrb[0].mxu0
        %688 = vmatprep.mubr.f32.mxu0 0.0
        %689 = vmatmul.mubr.f32.gmra.mrb[0].mxu0 %v525
        %v690 = vpop.f32.mrb[0].mxu0
        %v691 = vadd.f32 0.0, %v690
        %v692 = vpop.f32.mrb[0].mxu0
        %693 = vmatprep.mubr.f32.mxu0 0.0
        %694 = vmatmul.mubr.f32.gmra.mrb[0].mxu0 %v528
        %v695 = vpop.f32.mrb[0].mxu0
        %v696 = vadd.f32 0.0, %v695
        %v697 = vpop.f32.mrb[0].mxu0
        %698 = vmatprep.mubr.f32.mxu0 0.0
        %699 = vmatmul.mubr.f32.gmra.mrb[0].mxu0 %v531
        %v700 = vpop.f32.mrb[0].mxu0
        %v701 = vadd.f32 0.0, %v700
        %v702 = vpop.f32.mrb[0].mxu0
        %703 = vmatprep.mubr.f32.mxu0 0.0
        %704 = vmatmul.mubr.f32.gmra.mrb[0].mxu0 %v534
        %v705 = vpop.f32.mrb[0].mxu0
        %v706 = vadd.f32 0.0, %v705
        %v707 = vpop.f32.mrb[0].mxu0
        %708 = vmatprep.mubr.f32.mxu0 0.0
        %709 = vmatmul.mubr.f32.gmra.mrb[0].mxu0 %v537
        %v710 = vpop.f32.mrb[0].mxu0
        %v711 = vadd.f32 0.0, %v710
        %v712 = vpop.f32.mrb[0].mxu0
        %713 = vmatprep.mubr.f32.mxu0 0.0
        %714 = vmatmul.mubr.f32.gmra.mrb[0].mxu0 %v540
        %v715 = vpop.f32.mrb[0].mxu0
        %v716 = vadd.f32 0.0, %v715
        %v717 = vpop.f32.mrb[0].mxu0
        %718 = vmatprep.mubr.f32.mxu0 0.0
        %719 = vmatmul.mubr.f32.gmra.mrb[0].mxu0 %v543
        %v720 = vpop.f32.mrb[0].mxu0
        %v721 = vadd.f32 0.0, %v720
        %v722 = vpop.f32.mrb[0].mxu0
        %723 = vmatprep.mubr.f32.mxu0 0.0
        %724 = vmatmul.mubr.f32.gmra.mrb[0].mxu0 %v546
        %v725 = vpop.f32.mrb[0].mxu0
        %v726 = vadd.f32 0.0, %v725
        %v727 = vpop.f32.mrb[0].mxu0
        %728 = vmatprep.mubr.f32.mxu0 0.0
        %729 = vmatmul.mubr.f32.gmra.mrb[0].mxu0 %v549
        %v730 = vpop.f32.mrb[0].mxu0
        %v731 = vadd.f32 0.0, %v730
        %v732 = vpop.f32.mrb[0].mxu0
        %733 = vmatprep.mubr.f32.mxu0 0.0
        %734 = vmatmul.mubr.f32.gmra.mrb[0].mxu0 %v552
        %v735 = vpop.f32.mrb[0].mxu0
        %v736 = vadd.f32 0.0, %v735
        %v737 = vpop.f32.mrb[0].mxu0
        %738 = vmatprep.mubr.f32.mxu0 0.0
        %739 = vmatmul.mubr.f32.gmra.mrb[0].mxu0 %v555
        %v740 = vpop.f32.mrb[0].mxu0
        %v741 = vadd.f32 0.0, %v740
        %v742 = vpop.f32.mrb[0].mxu0
        %743 = vmatprep.mubr.f32.mxu0 0.0
        %744 = vmatmul.mubr.f32.gmra.mrb[0].mxu0 %v558
        %v745 = vpop.f32.mrb[0].mxu0
        %v746 = vadd.f32 0.0, %v745
        %v747 = vpop.f32.mrb[0].mxu0
        %748 = vmatprep.mubr.f32.mxu0 0.0
        %749 = vmatmul.mubr.f32.gmra.mrb[0].mxu0 %v561
        %v750 = vpop.f32.mrb[0].mxu0
        %v751 = vadd.f32 0.0, %v750
        %v752 = vpop.f32.mrb[0].mxu0
        %753 = vmatprep.mubr.f32.mxu0 0.0
        %754 = vmatmul.mubr.f32.gmra.mrb[0].mxu0 %v564
        %v755 = vpop.f32.mrb[0].mxu0
        %v756 = vadd.f32 0.0, %v755
        %v757 = vpop.f32.mrb[0].mxu0
        %758 = vdwg.mxu0
        %v759 = vld [vmem:[%s326] sm:$0xff]
        %v760 = vld [vmem:[%s326 + $0x8] sm:$0xff]
        %v761 = vld [vmem:[%s326 + $0x10] sm:$0xff]
        %v762 = vld [vmem:[%s326 + $0x18] sm:$0xff]
        %vm763 = vnez %v759
        %vm764 = vnez %v760
        %vm765 = vnez %v761
        %vm766 = vnez %v762
        %v767 = vsel %vm763, 16843009, 0
        %v768 = vsel %vm764, 16843009, 0
        %v769 = vsel %vm765, 16843009, 0
        %v770 = vsel %vm766, 16843009, 0
        %v771 = vunpack.c.0.s8 %v767
        %v772 = vunpack.c.1.s8 %v767
        %v773 = vunpack.c.2.s8 %v767
        %v774 = vunpack.c.3.s8 %v767
        %v775 = vunpack.c.0.s8 %v768
        %v776 = vunpack.c.1.s8 %v768
        %v777 = vunpack.c.2.s8 %v768
        %v778 = vunpack.c.3.s8 %v768
        %v779 = vunpack.c.0.s8 %v769
        %v780 = vunpack.c.1.s8 %v769
        %v781 = vunpack.c.2.s8 %v769
        %v782 = vunpack.c.3.s8 %v769
        %v783 = vunpack.c.0.s8 %v770
        %v784 = vunpack.c.1.s8 %v770
        %v785 = vunpack.c.2.s8 %v770
        %v786 = vunpack.c.3.s8 %v770
        %v787 = vpack.c.b16 %v771, %v771
        %v788 = vpack.c.b8 %v787, %v787
        %v789 = vpack.c.b16 %v772, %v772
        %v790 = vpack.c.b8 %v789, %v789
        %v791 = vpack.c.b16 %v773, %v773
        %v792 = vpack.c.b8 %v791, %v791
        %v793 = vpack.c.b16 %v774, %v774
        %v794 = vpack.c.b8 %v793, %v793
        %v795 = vpack.c.b16 %v775, %v775
        %v796 = vpack.c.b8 %v795, %v795
        %v797 = vpack.c.b16 %v776, %v776
        %v798 = vpack.c.b8 %v797, %v797
        %v799 = vpack.c.b16 %v777, %v777
        %v800 = vpack.c.b8 %v799, %v799
        %v801 = vpack.c.b16 %v778, %v778
        %v802 = vpack.c.b8 %v801, %v801
        %v803 = vpack.c.b16 %v779, %v779
        %v804 = vpack.c.b8 %v803, %v803
        %v805 = vpack.c.b16 %v780, %v780
        %v806 = vpack.c.b8 %v805, %v805
        %v807 = vpack.c.b16 %v781, %v781
        %v808 = vpack.c.b8 %v807, %v807
        %v809 = vpack.c.b16 %v782, %v782
        %v810 = vpack.c.b8 %v809, %v809
        %v811 = vpack.c.b16 %v783, %v783
        %v812 = vpack.c.b8 %v811, %v811
        %v813 = vpack.c.b16 %v784, %v784
        %v814 = vpack.c.b8 %v813, %v813
        %v815 = vpack.c.b16 %v785, %v785
        %v816 = vpack.c.b8 %v815, %v815
        %v817 = vpack.c.b16 %v786, %v786
        %v818 = vpack.c.b8 %v817, %v817
        %vm819 = vnez %v788
        %vm820 = vnez %v790
        %vm821 = vnez %v792
        %vm822 = vnez %v794
        %vm823 = vnez %v796
        %vm824 = vnez %v798
        %vm825 = vnez %v800
        %vm826 = vnez %v802
        %vm827 = vnez %v804
        %vm828 = vnez %v806
        %vm829 = vnez %v808
        %vm830 = vnez %v810
        %vm831 = vnez %v812
        %vm832 = vnez %v814
        %vm833 = vnez %v816
        %vm834 = vnez %v818
        %v835 = vsel %vm819, 16843009, 0
        %v836 = vsel %vm820, 16843009, 0
        %v837 = vsel %vm821, 16843009, 0
        %v838 = vsel %vm822, 16843009, 0
        %v839 = vsel %vm823, 16843009, 0
        %v840 = vsel %vm824, 16843009, 0
        %v841 = vsel %vm825, 16843009, 0
        %v842 = vsel %vm826, 16843009, 0
        %v843 = vsel %vm827, 16843009, 0
        %v844 = vsel %vm828, 16843009, 0
        %v845 = vsel %vm829, 16843009, 0
        %v846 = vsel %vm830, 16843009, 0
        %v847 = vsel %vm831, 16843009, 0
        %v848 = vsel %vm832, 16843009, 0
        %v849 = vsel %vm833, 16843009, 0
        %v850 = vsel %vm834, 16843009, 0
        %v851 = vunpack.c.0.s8 %v835
        %v852 = vunpack.c.0.s8 %v836
        %v853 = vunpack.c.0.s8 %v837
        %v854 = vunpack.c.0.s8 %v838
        %v855 = vunpack.c.0.s8 %v839
        %v856 = vunpack.c.0.s8 %v840
        %v857 = vunpack.c.0.s8 %v841
        %v858 = vunpack.c.0.s8 %v842
        %v859 = vunpack.c.0.s8 %v843
        %v860 = vunpack.c.0.s8 %v844
        %v861 = vunpack.c.0.s8 %v845
        %v862 = vunpack.c.0.s8 %v846
        %v863 = vunpack.c.0.s8 %v847
        %v864 = vunpack.c.0.s8 %v848
        %v865 = vunpack.c.0.s8 %v849
        %v866 = vunpack.c.0.s8 %v850
        %vm867 = vcmp.ne.s32.totalorder %v851, 0
        %vm868 = vcmp.ne.s32.totalorder %v852, 0
        %vm869 = vcmp.ne.s32.totalorder %v853, 0
        %vm870 = vcmp.ne.s32.totalorder %v854, 0
        %vm871 = vcmp.ne.s32.totalorder %v855, 0
        %vm872 = vcmp.ne.s32.totalorder %v856, 0
        %vm873 = vcmp.ne.s32.totalorder %v857, 0
        %vm874 = vcmp.ne.s32.totalorder %v858, 0
        %vm875 = vcmp.ne.s32.totalorder %v859, 0
        %vm876 = vcmp.ne.s32.totalorder %v860, 0
        %vm877 = vcmp.ne.s32.totalorder %v861, 0
        %vm878 = vcmp.ne.s32.totalorder %v862, 0
        %vm879 = vcmp.ne.s32.totalorder %v863, 0
        %vm880 = vcmp.ne.s32.totalorder %v864, 0
        %vm881 = vcmp.ne.s32.totalorder %v865, 0
        %vm882 = vcmp.ne.s32.totalorder %v866, 0
        %v883 = vsel %vm867, %v681, -1e+09
        %v884 = vsel %vm868, %v686, -1e+09
        %v885 = vsel %vm869, %v691, -1e+09
        %v886 = vsel %vm870, %v696, -1e+09
        %v887 = vsel %vm871, %v701, -1e+09
        %v888 = vsel %vm872, %v706, -1e+09
        %v889 = vsel %vm873, %v711, -1e+09
        %v890 = vsel %vm874, %v716, -1e+09
        %v891 = vsel %vm875, %v721, -1e+09
        %v892 = vsel %vm876, %v726, -1e+09
        %v893 = vsel %vm877, %v731, -1e+09
        %v894 = vsel %vm878, %v736, -1e+09
        %v895 = vsel %vm879, %v741, -1e+09
        %v896 = vsel %vm880, %v746, -1e+09
        %v897 = vsel %vm881, %v751, -1e+09
        %v898 = vsel %vm882, %v756, -1e+09
        %v899 = vld [vmem:[#allocation2] sm:$0xff]
        %v900 = vld [vmem:[#allocation2 + $0x8] sm:$0xff]
        %v901 = vld [vmem:[#allocation2 + $0x10] sm:$0xff]
        %v902 = vld [vmem:[#allocation2 + $0x18] sm:$0xff]
        %v903 = vld [vmem:[#allocation2 + $0x20] sm:$0xff]
        %v904 = vld [vmem:[#allocation2 + $0x28] sm:$0xff]
        %v905 = vld [vmem:[#allocation2 + $0x30] sm:$0xff]
        %v906 = vld [vmem:[#allocation2 + $0x38] sm:$0xff]
        %v907 = vld [vmem:[#allocation2 + $0x40] sm:$0xff]
        %v908 = vld [vmem:[#allocation2 + $0x48] sm:$0xff]
        %v909 = vld [vmem:[#allocation2 + $0x50] sm:$0xff]
        %v910 = vld [vmem:[#allocation2 + $0x58] sm:$0xff]
        %v911 = vld [vmem:[#allocation2 + $0x60] sm:$0xff]
        %v912 = vld [vmem:[#allocation2 + $0x68] sm:$0xff]
        %v913 = vld [vmem:[#allocation2 + $0x70] sm:$0xff]
        %v914 = vld [vmem:[#allocation2 + $0x78] sm:$0xff]
        %915 = vmax.xlane.f32.xlu0 %v883
        %v916 = vpop.xlane.xlu0 %915
        %917 = vmax.xlane.f32.xlu0 %v884
        %v918 = vpop.xlane.xlu0 %917
        %919 = vmax.xlane.f32.xlu0 %v885
        %v920 = vpop.xlane.xlu0 %919
        %921 = vmax.xlane.f32.xlu0 %v886
        %v922 = vpop.xlane.xlu0 %921
        %923 = vmax.xlane.f32.xlu0 %v887
        %v924 = vpop.xlane.xlu0 %923
        %925 = vmax.xlane.f32.xlu0 %v888
        %v926 = vpop.xlane.xlu0 %925
        %927 = vmax.xlane.f32.xlu0 %v889
        %v928 = vpop.xlane.xlu0 %927
        %929 = vmax.xlane.f32.xlu0 %v890
        %v930 = vpop.xlane.xlu0 %929
        %931 = vmax.xlane.f32.xlu0 %v891
        %v932 = vpop.xlane.xlu0 %931
        %933 = vmax.xlane.f32.xlu0 %v892
        %v934 = vpop.xlane.xlu0 %933
        %935 = vmax.xlane.f32.xlu0 %v893
        %v936 = vpop.xlane.xlu0 %935
        %937 = vmax.xlane.f32.xlu0 %v894
        %v938 = vpop.xlane.xlu0 %937
        %939 = vmax.xlane.f32.xlu0 %v895
        %v940 = vpop.xlane.xlu0 %939
        %941 = vmax.xlane.f32.xlu0 %v896
        %v942 = vpop.xlane.xlu0 %941
        %943 = vmax.xlane.f32.xlu0 %v897
        %v944 = vpop.xlane.xlu0 %943
        %945 = vmax.xlane.f32.xlu0 %v898
        %v946 = vpop.xlane.xlu0 %945
        %v947 = vmax.f32 %v899, %v916
        %v948 = vmax.f32 %v900, %v918
        %v949 = vmax.f32 %v901, %v920
        %v950 = vmax.f32 %v902, %v922
        %v951 = vmax.f32 %v903, %v924
        %v952 = vmax.f32 %v904, %v926
        %v953 = vmax.f32 %v905, %v928
        %v954 = vmax.f32 %v906, %v930
        %v955 = vmax.f32 %v907, %v932
        %v956 = vmax.f32 %v908, %v934
        %v957 = vmax.f32 %v909, %v936
        %v958 = vmax.f32 %v910, %v938
        %v959 = vmax.f32 %v911, %v940
        %v960 = vmax.f32 %v912, %v942
        %v961 = vmax.f32 %v913, %v944
        %v962 = vmax.f32 %v914, %v946
        %v963 = vsub.f32 %v899, %v947
        %v964 = vsub.f32 %v900, %v948
        %v965 = vsub.f32 %v901, %v949
        %v966 = vsub.f32 %v902, %v950
        %v967 = vsub.f32 %v903, %v951
        %v968 = vsub.f32 %v904, %v952
        %v969 = vsub.f32 %v905, %v953
        %v970 = vsub.f32 %v906, %v954
        %v971 = vsub.f32 %v907, %v955
        %v972 = vsub.f32 %v908, %v956
        %v973 = vsub.f32 %v909, %v957
        %v974 = vsub.f32 %v910, %v958
        %v975 = vsub.f32 %v911, %v959
        %v976 = vsub.f32 %v912, %v960
        %v977 = vsub.f32 %v913, %v961
        %v978 = vsub.f32 %v914, %v962
        %v979 = vmul.f32 %v963, 1.442695
        %v980 = vpow.pop %v979
        %v981 = vmul.f32 %v964, 1.442695
        %v982 = vpow.pop %v981
        %v983 = vmul.f32 %v965, 1.442695
        %v984 = vpow.pop %v983
        %v985 = vmul.f32 %v966, 1.442695
        %v986 = vpow.pop %v985
        %v987 = vmul.f32 %v967, 1.442695
        %v988 = vpow.pop %v987
        %v989 = vmul.f32 %v968, 1.442695
        %v990 = vpow.pop %v989
        %v991 = vmul.f32 %v969, 1.442695
        %v992 = vpow.pop %v991
        %v993 = vmul.f32 %v970, 1.442695
        %v994 = vpow.pop %v993
        %v995 = vmul.f32 %v971, 1.442695
        %v996 = vpow.pop %v995
        %v997 = vmul.f32 %v972, 1.442695
        %v998 = vpow.pop %v997
        %v999 = vmul.f32 %v973, 1.442695
        %v1000 = vpow.pop %v999
        %v1001 = vmul.f32 %v974, 1.442695
        %v1002 = vpow.pop %v1001
        %v1003 = vmul.f32 %v975, 1.442695
        %v1004 = vpow.pop %v1003
        %v1005 = vmul.f32 %v976, 1.442695
        %v1006 = vpow.pop %v1005
        %v1007 = vmul.f32 %v977, 1.442695
        %v1008 = vpow.pop %v1007
        %v1009 = vmul.f32 %v978, 1.442695
        %v1010 = vpow.pop %v1009
        %1012 = vset.pattern.permute.xlu0 0
        %1013 = vperm.xlu0 %1012, %v947
        %v1014 = vpop.permute.xlu0 %1013
        %1017 = vset.pattern.permute.xlu0 0
        %1018 = vperm.xlu0 %1017, %v948
        %v1019 = vpop.permute.xlu0 %1018
        %1022 = vset.pattern.permute.xlu0 0
        %1023 = vperm.xlu0 %1022, %v949
        %v1024 = vpop.permute.xlu0 %1023
        %1027 = vset.pattern.permute.xlu0 0
        %1028 = vperm.xlu0 %1027, %v950
        %v1029 = vpop.permute.xlu0 %1028
        %1032 = vset.pattern.permute.xlu0 0
        %1033 = vperm.xlu0 %1032, %v951
        %v1034 = vpop.permute.xlu0 %1033
        %1037 = vset.pattern.permute.xlu0 0
        %1038 = vperm.xlu0 %1037, %v952
        %v1039 = vpop.permute.xlu0 %1038
        %1042 = vset.pattern.permute.xlu0 0
        %1043 = vperm.xlu0 %1042, %v953
        %v1044 = vpop.permute.xlu0 %1043
        %1047 = vset.pattern.permute.xlu0 0
        %1048 = vperm.xlu0 %1047, %v954
        %v1049 = vpop.permute.xlu0 %1048
        %1052 = vset.pattern.permute.xlu0 0
        %1053 = vperm.xlu0 %1052, %v955
        %v1054 = vpop.permute.xlu0 %1053
        %1057 = vset.pattern.permute.xlu0 0
        %1058 = vperm.xlu0 %1057, %v956
        %v1059 = vpop.permute.xlu0 %1058
        %1062 = vset.pattern.permute.xlu0 0
        %1063 = vperm.xlu0 %1062, %v957
        %v1064 = vpop.permute.xlu0 %1063
        %1067 = vset.pattern.permute.xlu0 0
        %1068 = vperm.xlu0 %1067, %v958
        %v1069 = vpop.permute.xlu0 %1068
        %1072 = vset.pattern.permute.xlu0 0
        %1073 = vperm.xlu0 %1072, %v959
        %v1074 = vpop.permute.xlu0 %1073
        %1077 = vset.pattern.permute.xlu0 0
        %1078 = vperm.xlu0 %1077, %v960
        %v1079 = vpop.permute.xlu0 %1078
        %1082 = vset.pattern.permute.xlu0 0
        %1083 = vperm.xlu0 %1082, %v961
        %v1084 = vpop.permute.xlu0 %1083
        %1087 = vset.pattern.permute.xlu0 0
        %1088 = vperm.xlu0 %1087, %v962
        %v1089 = vpop.permute.xlu0 %1088
        %v1091 = vsub.f32 %v883, %v1014
        %v1092 = vsub.f32 %v884, %v1019
        %v1093 = vsub.f32 %v885, %v1024
        %v1094 = vsub.f32 %v886, %v1029
        %v1095 = vsub.f32 %v887, %v1034
        %v1096 = vsub.f32 %v888, %v1039
        %v1097 = vsub.f32 %v889, %v1044
        %v1098 = vsub.f32 %v890, %v1049
        %v1099 = vsub.f32 %v891, %v1054
        %v1100 = vsub.f32 %v892, %v1059
        %v1101 = vsub.f32 %v893, %v1064
        %v1102 = vsub.f32 %v894, %v1069
        %v1103 = vsub.f32 %v895, %v1074
        %v1104 = vsub.f32 %v896, %v1079
        %v1105 = vsub.f32 %v897, %v1084
        %v1106 = vsub.f32 %v898, %v1089
        %v1107 = vmul.f32 %v1091, 1.442695
        %v1108 = vpow.pop %v1107
        %v1109 = vmul.f32 %v1092, 1.442695
        %v1110 = vpow.pop %v1109
        %v1111 = vmul.f32 %v1093, 1.442695
        %v1112 = vpow.pop %v1111
        %v1113 = vmul.f32 %v1094, 1.442695
        %v1114 = vpow.pop %v1113
        %v1115 = vmul.f32 %v1095, 1.442695
        %v1116 = vpow.pop %v1115
        %v1117 = vmul.f32 %v1096, 1.442695
        %v1118 = vpow.pop %v1117
        %v1119 = vmul.f32 %v1097, 1.442695
        %v1120 = vpow.pop %v1119
        %v1121 = vmul.f32 %v1098, 1.442695
        %v1122 = vpow.pop %v1121
        %v1123 = vmul.f32 %v1099, 1.442695
        %v1124 = vpow.pop %v1123
        %v1125 = vmul.f32 %v1100, 1.442695
        %v1126 = vpow.pop %v1125
        %v1127 = vmul.f32 %v1101, 1.442695
        %v1128 = vpow.pop %v1127
        %v1129 = vmul.f32 %v1102, 1.442695
        %v1130 = vpow.pop %v1129
        %v1131 = vmul.f32 %v1103, 1.442695
        %v1132 = vpow.pop %v1131
        %v1133 = vmul.f32 %v1104, 1.442695
        %v1134 = vpow.pop %v1133
        %v1135 = vmul.f32 %v1105, 1.442695
        %v1136 = vpow.pop %v1135
        %v1137 = vmul.f32 %v1106, 1.442695
        %v1138 = vpow.pop %v1137
        %s1139 = smul.u32 %s27, 128
        %s1140 = sshra.s32 %s1139, 7
        %s1141 = sand.u32 %s1139, 127
        %s1142 = smul.addr %s1140, 8
        %s1143 = scalar_lea.vmem %s386, %s1142 [#allocation7]
        %1144 = vst [vmem:[%s1143] sm:$0xff] %v1108
        %1145 = vst [vmem:[%s1143 + $0x10] sm:$0xff] %v1110
        %1146 = vst [vmem:[%s1143 + $0x20] sm:$0xff] %v1112
        %1147 = vst [vmem:[%s1143 + $0x30] sm:$0xff] %v1114
        %1148 = vst [vmem:[%s1143 + $0x40] sm:$0xff] %v1116
        %1149 = vst [vmem:[%s1143 + $0x50] sm:$0xff] %v1118
        %1150 = vst [vmem:[%s1143 + $0x60] sm:$0xff] %v1120
        %1151 = vst [vmem:[%s1143 + $0x70] sm:$0xff] %v1122
        %1152 = vst [vmem:[%s1143 + $0x80] sm:$0xff] %v1124
        %1153 = vst [vmem:[%s1143 + $0x90] sm:$0xff] %v1126
        %1154 = vst [vmem:[%s1143 + $0xa0] sm:$0xff] %v1128
        %1155 = vst [vmem:[%s1143 + $0xb0] sm:$0xff] %v1130
        %1156 = vst [vmem:[%s1143 + $0xc0] sm:$0xff] %v1132
        %1157 = vst [vmem:[%s1143 + $0xd0] sm:$0xff] %v1134
        %1158 = vst [vmem:[%s1143 + $0xe0] sm:$0xff] %v1136
        %1159 = vst [vmem:[%s1143 + $0xf0] sm:$0xff] %v1138
        %s1160 = scalar_lea.vmem [#allocation5], %s1139
        %vm1161 = vcmask 7168
        %1162 = vst.msk [vmem:[%s1160] sm:$0xff] %vm1161, %v947
        %1163 = vst.msk [vmem:[%s1160 + $0x8] sm:$0xff] %vm1161, %v948
        %1164 = vst.msk [vmem:[%s1160 + $0x10] sm:$0xff] %vm1161, %v949
        %1165 = vst.msk [vmem:[%s1160 + $0x18] sm:$0xff] %vm1161, %v950
        %1166 = vst.msk [vmem:[%s1160 + $0x20] sm:$0xff] %vm1161, %v951
        %1167 = vst.msk [vmem:[%s1160 + $0x28] sm:$0xff] %vm1161, %v952
        %1168 = vst.msk [vmem:[%s1160 + $0x30] sm:$0xff] %vm1161, %v953
        %1169 = vst.msk [vmem:[%s1160 + $0x38] sm:$0xff] %vm1161, %v954
        %1170 = vst.msk [vmem:[%s1160 + $0x40] sm:$0xff] %vm1161, %v955
        %1171 = vst.msk [vmem:[%s1160 + $0x48] sm:$0xff] %vm1161, %v956
        %1172 = vst.msk [vmem:[%s1160 + $0x50] sm:$0xff] %vm1161, %v957
        %1173 = vst.msk [vmem:[%s1160 + $0x58] sm:$0xff] %vm1161, %v958
        %1174 = vst.msk [vmem:[%s1160 + $0x60] sm:$0xff] %vm1161, %v959
        %1175 = vst.msk [vmem:[%s1160 + $0x68] sm:$0xff] %vm1161, %v960
        %1176 = vst.msk [vmem:[%s1160 + $0x70] sm:$0xff] %vm1161, %v961
        %1177 = vst.msk [vmem:[%s1160 + $0x78] sm:$0xff] %vm1161, %v962
        %v1178 = vld [vmem:[#allocation3] sm:$0xff]
        %v1179 = vld [vmem:[#allocation3 + $0x8] sm:$0xff]
        %v1180 = vld [vmem:[#allocation3 + $0x10] sm:$0xff]
        %v1181 = vld [vmem:[#allocation3 + $0x18] sm:$0xff]
        %v1182 = vld [vmem:[#allocation3 + $0x20] sm:$0xff]
        %v1183 = vld [vmem:[#allocation3 + $0x28] sm:$0xff]
        %v1184 = vld [vmem:[#allocation3 + $0x30] sm:$0xff]
        %v1185 = vld [vmem:[#allocation3 + $0x38] sm:$0xff]
        %v1186 = vld [vmem:[#allocation3 + $0x40] sm:$0xff]
        %v1187 = vld [vmem:[#allocation3 + $0x48] sm:$0xff]
        %v1188 = vld [vmem:[#allocation3 + $0x50] sm:$0xff]
        %v1189 = vld [vmem:[#allocation3 + $0x58] sm:$0xff]
        %v1190 = vld [vmem:[#allocation3 + $0x60] sm:$0xff]
        %v1191 = vld [vmem:[#allocation3 + $0x68] sm:$0xff]
        %v1192 = vld [vmem:[#allocation3 + $0x70] sm:$0xff]
        %v1193 = vld [vmem:[#allocation3 + $0x78] sm:$0xff]
        %v1194 = vmul.f32 %v980, %v1178
        %v1195 = vmul.f32 %v982, %v1179
        %v1196 = vmul.f32 %v984, %v1180
        %v1197 = vmul.f32 %v986, %v1181
        %v1198 = vmul.f32 %v988, %v1182
        %v1199 = vmul.f32 %v990, %v1183
        %v1200 = vmul.f32 %v992, %v1184
        %v1201 = vmul.f32 %v994, %v1185
        %v1202 = vmul.f32 %v996, %v1186
        %v1203 = vmul.f32 %v998, %v1187
        %v1204 = vmul.f32 %v1000, %v1188
        %v1205 = vmul.f32 %v1002, %v1189
        %v1206 = vmul.f32 %v1004, %v1190
        %v1207 = vmul.f32 %v1006, %v1191
        %v1208 = vmul.f32 %v1008, %v1192
        %v1209 = vmul.f32 %v1010, %v1193
        %1210 = vadd.xlane.f32.xlu0 %v1108
        %v1211 = vpop.xlane.xlu0 %1210
        %1212 = vadd.xlane.f32.xlu0 %v1110
        %v1213 = vpop.xlane.xlu0 %1212
        %1214 = vadd.xlane.f32.xlu0 %v1112
        %v1215 = vpop.xlane.xlu0 %1214
        %1216 = vadd.xlane.f32.xlu0 %v1114
        %v1217 = vpop.xlane.xlu0 %1216
        %1218 = vadd.xlane.f32.xlu0 %v1116
        %v1219 = vpop.xlane.xlu0 %1218
        %1220 = vadd.xlane.f32.xlu0 %v1118
        %v1221 = vpop.xlane.xlu0 %1220
        %1222 = vadd.xlane.f32.xlu0 %v1120
        %v1223 = vpop.xlane.xlu0 %1222
        %1224 = vadd.xlane.f32.xlu0 %v1122
        %v1225 = vpop.xlane.xlu0 %1224
        %1226 = vadd.xlane.f32.xlu0 %v1124
        %v1227 = vpop.xlane.xlu0 %1226
        %1228 = vadd.xlane.f32.xlu0 %v1126
        %v1229 = vpop.xlane.xlu0 %1228
        %1230 = vadd.xlane.f32.xlu0 %v1128
        %v1231 = vpop.xlane.xlu0 %1230
        %1232 = vadd.xlane.f32.xlu0 %v1130
        %v1233 = vpop.xlane.xlu0 %1232
        %1234 = vadd.xlane.f32.xlu0 %v1132
        %v1235 = vpop.xlane.xlu0 %1234
        %1236 = vadd.xlane.f32.xlu0 %v1134
        %v1237 = vpop.xlane.xlu0 %1236
        %1238 = vadd.xlane.f32.xlu0 %v1136
        %v1239 = vpop.xlane.xlu0 %1238
        %1240 = vadd.xlane.f32.xlu0 %v1138
        %v1241 = vpop.xlane.xlu0 %1240
        %v1242 = vadd.f32 %v1194, %v1211
        %v1243 = vadd.f32 %v1195, %v1213
        %v1244 = vadd.f32 %v1196, %v1215
        %v1245 = vadd.f32 %v1197, %v1217
        %v1246 = vadd.f32 %v1198, %v1219
        %v1247 = vadd.f32 %v1199, %v1221
        %v1248 = vadd.f32 %v1200, %v1223
        %v1249 = vadd.f32 %v1201, %v1225
        %v1250 = vadd.f32 %v1202, %v1227
        %v1251 = vadd.f32 %v1203, %v1229
        %v1252 = vadd.f32 %v1204, %v1231
        %v1253 = vadd.f32 %v1205, %v1233
        %v1254 = vadd.f32 %v1206, %v1235
        %v1255 = vadd.f32 %v1207, %v1237
        %v1256 = vadd.f32 %v1208, %v1239
        %v1257 = vadd.f32 %v1209, %v1241
        %1258 = vst.msk [vmem:[#allocation3] sm:$0xff] %vm1161, %v1242
        %1259 = vst.msk [vmem:[#allocation3 + $0x8] sm:$0xff] %vm1161, %v1243
        %1260 = vst.msk [vmem:[#allocation3 + $0x10] sm:$0xff] %vm1161, %v1244
        %1261 = vst.msk [vmem:[#allocation3 + $0x18] sm:$0xff] %vm1161, %v1245
        %1262 = vst.msk [vmem:[#allocation3 + $0x20] sm:$0xff] %vm1161, %v1246
        %1263 = vst.msk [vmem:[#allocation3 + $0x28] sm:$0xff] %vm1161, %v1247
        %1264 = vst.msk [vmem:[#allocation3 + $0x30] sm:$0xff] %vm1161, %v1248
        %1265 = vst.msk [vmem:[#allocation3 + $0x38] sm:$0xff] %vm1161, %v1249
        %1266 = vst.msk [vmem:[#allocation3 + $0x40] sm:$0xff] %vm1161, %v1250
        %1267 = vst.msk [vmem:[#allocation3 + $0x48] sm:$0xff] %vm1161, %v1251
        %1268 = vst.msk [vmem:[#allocation3 + $0x50] sm:$0xff] %vm1161, %v1252
        %1269 = vst.msk [vmem:[#allocation3 + $0x58] sm:$0xff] %vm1161, %v1253
        %1270 = vst.msk [vmem:[#allocation3 + $0x60] sm:$0xff] %vm1161, %v1254
        %1271 = vst.msk [vmem:[#allocation3 + $0x68] sm:$0xff] %vm1161, %v1255
        %1272 = vst.msk [vmem:[#allocation3 + $0x70] sm:$0xff] %vm1161, %v1256
        %1273 = vst.msk [vmem:[#allocation3 + $0x78] sm:$0xff] %vm1161, %v1257
        %v1274 = vld [vmem:[#allocation4] sm:$0xff]
        %v1275 = vld [vmem:[#allocation4 + $0x8] sm:$0xff]
        %v1276 = vld [vmem:[#allocation4 + $0x10] sm:$0xff]
        %v1277 = vld [vmem:[#allocation4 + $0x18] sm:$0xff]
        %v1278 = vld [vmem:[#allocation4 + $0x20] sm:$0xff]
        %v1279 = vld [vmem:[#allocation4 + $0x28] sm:$0xff]
        %v1280 = vld [vmem:[#allocation4 + $0x30] sm:$0xff]
        %v1281 = vld [vmem:[#allocation4 + $0x38] sm:$0xff]
        %v1282 = vld [vmem:[#allocation4 + $0x40] sm:$0xff]
        %v1283 = vld [vmem:[#allocation4 + $0x48] sm:$0xff]
        %v1284 = vld [vmem:[#allocation4 + $0x50] sm:$0xff]
        %v1285 = vld [vmem:[#allocation4 + $0x58] sm:$0xff]
        %v1286 = vld [vmem:[#allocation4 + $0x60] sm:$0xff]
        %v1287 = vld [vmem:[#allocation4 + $0x68] sm:$0xff]
        %v1288 = vld [vmem:[#allocation4 + $0x70] sm:$0xff]
        %v1289 = vld [vmem:[#allocation4 + $0x78] sm:$0xff]
        %1291 = vset.pattern.permute.xlu0 0
        %1292 = vperm.xlu0 %1291, %v980
        %v1293 = vpop.permute.xlu0 %1292
        %1296 = vset.pattern.permute.xlu0 0
        %1297 = vperm.xlu0 %1296, %v982
        %v1298 = vpop.permute.xlu0 %1297
        %1301 = vset.pattern.permute.xlu0 0
        %1302 = vperm.xlu0 %1301, %v984
        %v1303 = vpop.permute.xlu0 %1302
        %1306 = vset.pattern.permute.xlu0 0
        %1307 = vperm.xlu0 %1306, %v986
        %v1308 = vpop.permute.xlu0 %1307
        %1311 = vset.pattern.permute.xlu0 0
        %1312 = vperm.xlu0 %1311, %v988
        %v1313 = vpop.permute.xlu0 %1312
        %1316 = vset.pattern.permute.xlu0 0
        %1317 = vperm.xlu0 %1316, %v990
        %v1318 = vpop.permute.xlu0 %1317
        %1321 = vset.pattern.permute.xlu0 0
        %1322 = vperm.xlu0 %1321, %v992
        %v1323 = vpop.permute.xlu0 %1322
        %1326 = vset.pattern.permute.xlu0 0
        %1327 = vperm.xlu0 %1326, %v994
        %v1328 = vpop.permute.xlu0 %1327
        %1331 = vset.pattern.permute.xlu0 0
        %1332 = vperm.xlu0 %1331, %v996
        %v1333 = vpop.permute.xlu0 %1332
        %1336 = vset.pattern.permute.xlu0 0
        %1337 = vperm.xlu0 %1336, %v998
        %v1338 = vpop.permute.xlu0 %1337
        %1341 = vset.pattern.permute.xlu0 0
        %1342 = vperm.xlu0 %1341, %v1000
        %v1343 = vpop.permute.xlu0 %1342
        %1346 = vset.pattern.permute.xlu0 0
        %1347 = vperm.xlu0 %1346, %v1002
        %v1348 = vpop.permute.xlu0 %1347
        %1351 = vset.pattern.permute.xlu0 0
        %1352 = vperm.xlu0 %1351, %v1004
        %v1353 = vpop.permute.xlu0 %1352
        %1356 = vset.pattern.permute.xlu0 0
        %1357 = vperm.xlu0 %1356, %v1006
        %v1358 = vpop.permute.xlu0 %1357
        %1361 = vset.pattern.permute.xlu0 0
        %1362 = vperm.xlu0 %1361, %v1008
        %v1363 = vpop.permute.xlu0 %1362
        %1366 = vset.pattern.permute.xlu0 0
        %1367 = vperm.xlu0 %1366, %v1010
        %v1368 = vpop.permute.xlu0 %1367
        %v1370 = vmul.f32 %v1293, %v1274
        %v1371 = vmul.f32 %v1298, %v1275
        %v1372 = vmul.f32 %v1303, %v1276
        %v1373 = vmul.f32 %v1308, %v1277
        %v1374 = vmul.f32 %v1313, %v1278
        %v1375 = vmul.f32 %v1318, %v1279
        %v1376 = vmul.f32 %v1323, %v1280
        %v1377 = vmul.f32 %v1328, %v1281
        %v1378 = vmul.f32 %v1333, %v1282
        %v1379 = vmul.f32 %v1338, %v1283
        %v1380 = vmul.f32 %v1343, %v1284
        %v1381 = vmul.f32 %v1348, %v1285
        %v1382 = vmul.f32 %v1353, %v1286
        %v1383 = vmul.f32 %v1358, %v1287
        %v1384 = vmul.f32 %v1363, %v1288
        %v1385 = vmul.f32 %v1368, %v1289
        %v1386 = vld [vmem:[%s415] sm:$0xff]
        %v1387 = vld [vmem:[%s415 + $0x8] sm:$0xff]
        %v1388 = vld [vmem:[%s415 + $0x10] sm:$0xff]
        %v1389 = vld [vmem:[%s415 + $0x18] sm:$0xff]
        %v1390 = vld [vmem:[%s415 + $0x20] sm:$0xff]
        %v1391 = vld [vmem:[%s415 + $0x28] sm:$0xff]
        %v1392 = vld [vmem:[%s415 + $0x30] sm:$0xff]
        %v1393 = vld [vmem:[%s415 + $0x38] sm:$0xff]
        %v1394 = vld [vmem:[%s415 + $0x40] sm:$0xff]
        %v1395 = vld [vmem:[%s415 + $0x48] sm:$0xff]
        %v1396 = vld [vmem:[%s415 + $0x50] sm:$0xff]
        %v1397 = vld [vmem:[%s415 + $0x58] sm:$0xff]
        %v1398 = vld [vmem:[%s415 + $0x60] sm:$0xff]
        %v1399 = vld [vmem:[%s415 + $0x68] sm:$0xff]
        %v1400 = vld [vmem:[%s415 + $0x70] sm:$0xff]
        %v1401 = vld [vmem:[%s415 + $0x78] sm:$0xff]
        %1402 = vmatprep.subr.mxu0 0.0
        %1403 = vmatpush1.msra.mxu0 %v1386
        %1404 = vmatprep.subr.mxu0 0.0
        %1405 = vmatpush1.msra.mxu0 %v1387
        %1406 = vmatprep.subr.mxu0 0.0
        %1407 = vmatpush1.msra.mxu0 %v1388
        %1408 = vmatprep.subr.mxu0 0.0
        %1409 = vmatpush1.msra.mxu0 %v1389
        %1410 = vmatprep.subr.mxu0 0.0
        %1411 = vmatpush1.msra.mxu0 %v1390
        %1412 = vmatprep.subr.mxu0 0.0
        %1413 = vmatpush1.msra.mxu0 %v1391
        %1414 = vmatprep.subr.mxu0 0.0
        %1415 = vmatpush1.msra.mxu0 %v1392
        %1416 = vmatprep.subr.mxu0 0.0
        %1417 = vmatpush1.msra.mxu0 %v1393
        %1418 = vmatprep.subr.mxu0 0.0
        %1419 = vmatpush1.msra.mxu0 %v1394
        %1420 = vmatprep.subr.mxu0 0.0
        %1421 = vmatpush1.msra.mxu0 %v1395
        %1422 = vmatprep.subr.mxu0 0.0
        %1423 = vmatpush1.msra.mxu0 %v1396
        %1424 = vmatprep.subr.mxu0 0.0
        %1425 = vmatpush1.msra.mxu0 %v1397
        %1426 = vmatprep.subr.mxu0 0.0
        %1427 = vmatpush1.msra.mxu0 %v1398
        %1428 = vmatprep.subr.mxu0 0.0
        %1429 = vmatpush1.msra.mxu0 %v1399
        %1430 = vmatprep.subr.mxu0 0.0
        %1431 = vmatpush1.msra.mxu0 %v1400
        %1432 = vmatprep.subr.mxu0 0.0
        %1433 = vmatpush1.msra.mxu0 %v1401
        %1434 = vmatprep.subr.mxu0 0.0
        %1435 = vmatpush1.msra.mxu0 0.0
        %1436 = vmatprep.subr.mxu0 0.0
        %1437 = vmatpush1.msra.mxu0 0.0
        %1438 = vmatprep.subr.mxu0 0.0
        %1439 = vmatpush1.msra.mxu0 0.0
        %1440 = vmatprep.subr.mxu0 0.0
        %1441 = vmatpush1.msra.mxu0 0.0
        %1442 = vmatprep.subr.mxu0 0.0
        %1443 = vmatpush1.msra.mxu0 0.0
        %1444 = vmatprep.subr.mxu0 0.0
        %1445 = vmatpush1.msra.mxu0 0.0
        %1446 = vmatprep.subr.mxu0 0.0
        %1447 = vmatpush1.msra.mxu0 0.0
        %1448 = vmatprep.subr.mxu0 0.0
        %1449 = vmatpush1.msra.mxu0 0.0
        %1450 = vmatprep.subr.mxu0 0.0
        %1451 = vmatpush1.msra.mxu0 0.0
        %1452 = vmatprep.subr.mxu0 0.0
        %1453 = vmatpush1.msra.mxu0 0.0
        %1454 = vmatprep.subr.mxu0 0.0
        %1455 = vmatpush1.msra.mxu0 0.0
        %1456 = vmatprep.subr.mxu0 0.0
        %1457 = vmatpush1.msra.mxu0 0.0
        %1458 = vmatprep.subr.mxu0 0.0
        %1459 = vmatpush1.msra.mxu0 0.0
        %1460 = vmatprep.subr.mxu0 0.0
        %1461 = vmatpush1.msra.mxu0 0.0
        %1462 = vmatprep.subr.mxu0 0.0
        %1463 = vmatpush1.msra.mxu0 0.0
        %1464 = vmatprep.subr.mxu0 0.0
        %1465 = vmatpush1.msra.mxu0 0.0
        %1466 = vmatprep.mubr.f32.mxu0 0.0
        %1467 = vmatmul.mubr.f32.gmra.mrb[0].mxu0 %v1108
        %v1468 = vpop.f32.mrb[0].mxu0
        %v1469 = vadd.f32 0.0, %v1468
        %v1470 = vpop.f32.mrb[0].mxu0
        %1471 = vmatprep.mubr.f32.mxu0 0.0
        %1472 = vmatmul.mubr.f32.gmra.mrb[0].mxu0 %v1110
        %v1473 = vpop.f32.mrb[0].mxu0
        %v1474 = vadd.f32 0.0, %v1473
        %v1475 = vpop.f32.mrb[0].mxu0
        %1476 = vmatprep.mubr.f32.mxu0 0.0
        %1477 = vmatmul.mubr.f32.gmra.mrb[0].mxu0 %v1112
        %v1478 = vpop.f32.mrb[0].mxu0
        %v1479 = vadd.f32 0.0, %v1478
        %v1480 = vpop.f32.mrb[0].mxu0
        %1481 = vmatprep.mubr.f32.mxu0 0.0
        %1482 = vmatmul.mubr.f32.gmra.mrb[0].mxu0 %v1114
        %v1483 = vpop.f32.mrb[0].mxu0
        %v1484 = vadd.f32 0.0, %v1483
        %v1485 = vpop.f32.mrb[0].mxu0
        %1486 = vmatprep.mubr.f32.mxu0 0.0
        %1487 = vmatmul.mubr.f32.gmra.mrb[0].mxu0 %v1116
        %v1488 = vpop.f32.mrb[0].mxu0
        %v1489 = vadd.f32 0.0, %v1488
        %v1490 = vpop.f32.mrb[0].mxu0
        %1491 = vmatprep.mubr.f32.mxu0 0.0
        %1492 = vmatmul.mubr.f32.gmra.mrb[0].mxu0 %v1118
        %v1493 = vpop.f32.mrb[0].mxu0
        %v1494 = vadd.f32 0.0, %v1493
        %v1495 = vpop.f32.mrb[0].mxu0
        %1496 = vmatprep.mubr.f32.mxu0 0.0
        %1497 = vmatmul.mubr.f32.gmra.mrb[0].mxu0 %v1120
        %v1498 = vpop.f32.mrb[0].mxu0
        %v1499 = vadd.f32 0.0, %v1498
        %v1500 = vpop.f32.mrb[0].mxu0
        %1501 = vmatprep.mubr.f32.mxu0 0.0
        %1502 = vmatmul.mubr.f32.gmra.mrb[0].mxu0 %v1122
        %v1503 = vpop.f32.mrb[0].mxu0
        %v1504 = vadd.f32 0.0, %v1503
        %v1505 = vpop.f32.mrb[0].mxu0
        %1506 = vmatprep.mubr.f32.mxu0 0.0
        %1507 = vmatmul.mubr.f32.gmra.mrb[0].mxu0 %v1124
        %v1508 = vpop.f32.mrb[0].mxu0
        %v1509 = vadd.f32 0.0, %v1508
        %v1510 = vpop.f32.mrb[0].mxu0
        %1511 = vmatprep.mubr.f32.mxu0 0.0
        %1512 = vmatmul.mubr.f32.gmra.mrb[0].mxu0 %v1126
        %v1513 = vpop.f32.mrb[0].mxu0
        %v1514 = vadd.f32 0.0, %v1513
        %v1515 = vpop.f32.mrb[0].mxu0
        %1516 = vmatprep.mubr.f32.mxu0 0.0
        %1517 = vmatmul.mubr.f32.gmra.mrb[0].mxu0 %v1128
        %v1518 = vpop.f32.mrb[0].mxu0
        %v1519 = vadd.f32 0.0, %v1518
        %v1520 = vpop.f32.mrb[0].mxu0
        %1521 = vmatprep.mubr.f32.mxu0 0.0
        %1522 = vmatmul.mubr.f32.gmra.mrb[0].mxu0 %v1130
        %v1523 = vpop.f32.mrb[0].mxu0
        %v1524 = vadd.f32 0.0, %v1523
        %v1525 = vpop.f32.mrb[0].mxu0
        %1526 = vmatprep.mubr.f32.mxu0 0.0
        %1527 = vmatmul.mubr.f32.gmra.mrb[0].mxu0 %v1132
        %v1528 = vpop.f32.mrb[0].mxu0
        %v1529 = vadd.f32 0.0, %v1528
        %v1530 = vpop.f32.mrb[0].mxu0
        %1531 = vmatprep.mubr.f32.mxu0 0.0
        %1532 = vmatmul.mubr.f32.gmra.mrb[0].mxu0 %v1134
        %v1533 = vpop.f32.mrb[0].mxu0
        %v1534 = vadd.f32 0.0, %v1533
        %v1535 = vpop.f32.mrb[0].mxu0
        %1536 = vmatprep.mubr.f32.mxu0 0.0
        %1537 = vmatmul.mubr.f32.gmra.mrb[0].mxu0 %v1136
        %v1538 = vpop.f32.mrb[0].mxu0
        %v1539 = vadd.f32 0.0, %v1538
        %v1540 = vpop.f32.mrb[0].mxu0
        %1541 = vmatprep.mubr.f32.mxu0 0.0
        %1542 = vmatmul.mubr.f32.gmra.mrb[0].mxu0 %v1138
        %v1543 = vpop.f32.mrb[0].mxu0
        %v1544 = vadd.f32 0.0, %v1543
        %v1545 = vpop.f32.mrb[0].mxu0
        %1546 = vdwg.mxu0
        %v1547 = vadd.f32 %v1370, %v1469
        %v1548 = vadd.f32 %v1371, %v1474
        %v1549 = vadd.f32 %v1372, %v1479
        %v1550 = vadd.f32 %v1373, %v1484
        %v1551 = vadd.f32 %v1374, %v1489
        %v1552 = vadd.f32 %v1375, %v1494
        %v1553 = vadd.f32 %v1376, %v1499
        %v1554 = vadd.f32 %v1377, %v1504
        %v1555 = vadd.f32 %v1378, %v1509
        %v1556 = vadd.f32 %v1379, %v1514
        %v1557 = vadd.f32 %v1380, %v1519
        %v1558 = vadd.f32 %v1381, %v1524
        %v1559 = vadd.f32 %v1382, %v1529
        %v1560 = vadd.f32 %v1383, %v1534
        %v1561 = vadd.f32 %v1384, %v1539
        %v1562 = vadd.f32 %v1385, %v1544
        %1563 = vst.msk [vmem:[#allocation4] sm:$0xff] %vm517, %v1547
        %1564 = vst.msk [vmem:[#allocation4 + $0x8] sm:$0xff] %vm517, %v1548
        %1565 = vst.msk [vmem:[#allocation4 + $0x10] sm:$0xff] %vm517, %v1549
        %1566 = vst.msk [vmem:[#allocation4 + $0x18] sm:$0xff] %vm517, %v1550
        %1567 = vst.msk [vmem:[#allocation4 + $0x20] sm:$0xff] %vm517, %v1551
        %1568 = vst.msk [vmem:[#allocation4 + $0x28] sm:$0xff] %vm517, %v1552
        %1569 = vst.msk [vmem:[#allocation4 + $0x30] sm:$0xff] %vm517, %v1553
        %1570 = vst.msk [vmem:[#allocation4 + $0x38] sm:$0xff] %vm517, %v1554
        %1571 = vst.msk [vmem:[#allocation4 + $0x40] sm:$0xff] %vm517, %v1555
        %1572 = vst.msk [vmem:[#allocation4 + $0x48] sm:$0xff] %vm517, %v1556
        %1573 = vst.msk [vmem:[#allocation4 + $0x50] sm:$0xff] %vm517, %v1557
        %1574 = vst.msk [vmem:[#allocation4 + $0x58] sm:$0xff] %vm517, %v1558
        %1575 = vst.msk [vmem:[#allocation4 + $0x60] sm:$0xff] %vm517, %v1559
        %1576 = vst.msk [vmem:[#allocation4 + $0x68] sm:$0xff] %vm517, %v1560
        %1577 = vst.msk [vmem:[#allocation4 + $0x70] sm:$0xff] %vm517, %v1561
        %1578 = vst.msk [vmem:[#allocation4 + $0x78] sm:$0xff] %vm517, %v1562
        %1579 = vst.msk [vmem:[#allocation2] sm:$0xff] %vm1161, %v947
        %1580 = vst.msk [vmem:[#allocation2 + $0x8] sm:$0xff] %vm1161, %v948
        %1581 = vst.msk [vmem:[#allocation2 + $0x10] sm:$0xff] %vm1161, %v949
        %1582 = vst.msk [vmem:[#allocation2 + $0x18] sm:$0xff] %vm1161, %v950
        %1583 = vst.msk [vmem:[#allocation2 + $0x20] sm:$0xff] %vm1161, %v951
        %1584 = vst.msk [vmem:[#allocation2 + $0x28] sm:$0xff] %vm1161, %v952
        %1585 = vst.msk [vmem:[#allocation2 + $0x30] sm:$0xff] %vm1161, %v953
        %1586 = vst.msk [vmem:[#allocation2 + $0x38] sm:$0xff] %vm1161, %v954
        %1587 = vst.msk [vmem:[#allocation2 + $0x40] sm:$0xff] %vm1161, %v955
        %1588 = vst.msk [vmem:[#allocation2 + $0x48] sm:$0xff] %vm1161, %v956
        %1589 = vst.msk [vmem:[#allocation2 + $0x50] sm:$0xff] %vm1161, %v957
        %1590 = vst.msk [vmem:[#allocation2 + $0x58] sm:$0xff] %vm1161, %v958
        %1591 = vst.msk [vmem:[#allocation2 + $0x60] sm:$0xff] %vm1161, %v959
        %1592 = vst.msk [vmem:[#allocation2 + $0x68] sm:$0xff] %vm1161, %v960
        %1593 = vst.msk [vmem:[#allocation2 + $0x70] sm:$0xff] %vm1161, %v961
        %1594 = vst.msk [vmem:[#allocation2 + $0x78] sm:$0xff] %vm1161, %v962
        %p1595 = scmp.eq.s32.totalorder %s27, 1
        // Predicated region
        $region79: #{tpu_custom_call.1} parent=69 // pred_check
          %p1596 = pneg %p1595
        $region80: #{tpu_custom_call.1} parent=69 // pred_check_branch
          %1598 = sbr.rel (%p1596) target = $region82
        $region81: #{tpu_custom_call.1} parent=69 // pred_region
          %v1599 = vld [vmem:[#allocation3] sm:$0xff]
          %v1600 = vld [vmem:[#allocation3 + $0x8] sm:$0xff]
          %v1601 = vld [vmem:[#allocation3 + $0x10] sm:$0xff]
          %v1602 = vld [vmem:[#allocation3 + $0x18] sm:$0xff]
          %v1603 = vld [vmem:[#allocation3 + $0x20] sm:$0xff]
          %v1604 = vld [vmem:[#allocation3 + $0x28] sm:$0xff]
          %v1605 = vld [vmem:[#allocation3 + $0x30] sm:$0xff]
          %v1606 = vld [vmem:[#allocation3 + $0x38] sm:$0xff]
          %v1607 = vld [vmem:[#allocation3 + $0x40] sm:$0xff]
          %v1608 = vld [vmem:[#allocation3 + $0x48] sm:$0xff]
          %v1609 = vld [vmem:[#allocation3 + $0x50] sm:$0xff]
          %v1610 = vld [vmem:[#allocation3 + $0x58] sm:$0xff]
          %v1611 = vld [vmem:[#allocation3 + $0x60] sm:$0xff]
          %v1612 = vld [vmem:[#allocation3 + $0x68] sm:$0xff]
          %v1613 = vld [vmem:[#allocation3 + $0x70] sm:$0xff]
          %v1614 = vld [vmem:[#allocation3 + $0x78] sm:$0xff]
          %v1615 = vrcp.pop %v1599
          %v1616 = vmul.f32 1.0, %v1615
          %v1617 = vrcp.pop %v1600
          %v1618 = vmul.f32 1.0, %v1617
          %v1619 = vrcp.pop %v1601
          %v1620 = vmul.f32 1.0, %v1619
          %v1621 = vrcp.pop %v1602
          %v1622 = vmul.f32 1.0, %v1621
          %v1623 = vrcp.pop %v1603
          %v1624 = vmul.f32 1.0, %v1623
          %v1625 = vrcp.pop %v1604
          %v1626 = vmul.f32 1.0, %v1625
          %v1627 = vrcp.pop %v1605
          %v1628 = vmul.f32 1.0, %v1627
          %v1629 = vrcp.pop %v1606
          %v1630 = vmul.f32 1.0, %v1629
          %v1631 = vrcp.pop %v1607
          %v1632 = vmul.f32 1.0, %v1631
          %v1633 = vrcp.pop %v1608
          %v1634 = vmul.f32 1.0, %v1633
          %v1635 = vrcp.pop %v1609
          %v1636 = vmul.f32 1.0, %v1635
          %v1637 = vrcp.pop %v1610
          %v1638 = vmul.f32 1.0, %v1637
          %v1639 = vrcp.pop %v1611
          %v1640 = vmul.f32 1.0, %v1639
          %v1641 = vrcp.pop %v1612
          %v1642 = vmul.f32 1.0, %v1641
          %v1643 = vrcp.pop %v1613
          %v1644 = vmul.f32 1.0, %v1643
          %v1645 = vrcp.pop %v1614
          %v1646 = vmul.f32 1.0, %v1645
          %v1647 = vld [vmem:[#allocation2] sm:$0xff]
          %v1648 = vld [vmem:[#allocation2 + $0x8] sm:$0xff]
          %v1649 = vld [vmem:[#allocation2 + $0x10] sm:$0xff]
          %v1650 = vld [vmem:[#allocation2 + $0x18] sm:$0xff]
          %v1651 = vld [vmem:[#allocation2 + $0x20] sm:$0xff]
          %v1652 = vld [vmem:[#allocation2 + $0x28] sm:$0xff]
          %v1653 = vld [vmem:[#allocation2 + $0x30] sm:$0xff]
          %v1654 = vld [vmem:[#allocation2 + $0x38] sm:$0xff]
          %v1655 = vld [vmem:[#allocation2 + $0x40] sm:$0xff]
          %v1656 = vld [vmem:[#allocation2 + $0x48] sm:$0xff]
          %v1657 = vld [vmem:[#allocation2 + $0x50] sm:$0xff]
          %v1658 = vld [vmem:[#allocation2 + $0x58] sm:$0xff]
          %v1659 = vld [vmem:[#allocation2 + $0x60] sm:$0xff]
          %v1660 = vld [vmem:[#allocation2 + $0x68] sm:$0xff]
          %v1661 = vld [vmem:[#allocation2 + $0x70] sm:$0xff]
          %v1662 = vld [vmem:[#allocation2 + $0x78] sm:$0xff]
          %v1663 = vld [vmem:[#allocation4] sm:$0xff]
          %v1664 = vld [vmem:[#allocation4 + $0x8] sm:$0xff]
          %v1665 = vld [vmem:[#allocation4 + $0x10] sm:$0xff]
          %v1666 = vld [vmem:[#allocation4 + $0x18] sm:$0xff]
          %v1667 = vld [vmem:[#allocation4 + $0x20] sm:$0xff]
          %v1668 = vld [vmem:[#allocation4 + $0x28] sm:$0xff]
          %v1669 = vld [vmem:[#allocation4 + $0x30] sm:$0xff]
          %v1670 = vld [vmem:[#allocation4 + $0x38] sm:$0xff]
          %v1671 = vld [vmem:[#allocation4 + $0x40] sm:$0xff]
          %v1672 = vld [vmem:[#allocation4 + $0x48] sm:$0xff]
          %v1673 = vld [vmem:[#allocation4 + $0x50] sm:$0xff]
          %v1674 = vld [vmem:[#allocation4 + $0x58] sm:$0xff]
          %v1675 = vld [vmem:[#allocation4 + $0x60] sm:$0xff]
          %v1676 = vld [vmem:[#allocation4 + $0x68] sm:$0xff]
          %v1677 = vld [vmem:[#allocation4 + $0x70] sm:$0xff]
          %v1678 = vld [vmem:[#allocation4 + $0x78] sm:$0xff]
          %1680 = vset.pattern.permute.xlu0 0
          %1681 = vperm.xlu0 %1680, %v1616
          %v1682 = vpop.permute.xlu0 %1681
          %1685 = vset.pattern.permute.xlu0 0
          %1686 = vperm.xlu0 %1685, %v1618
          %v1687 = vpop.permute.xlu0 %1686
          %1690 = vset.pattern.permute.xlu0 0
          %1691 = vperm.xlu0 %1690, %v1620
          %v1692 = vpop.permute.xlu0 %1691
          %1695 = vset.pattern.permute.xlu0 0
          %1696 = vperm.xlu0 %1695, %v1622
          %v1697 = vpop.permute.xlu0 %1696
          %1700 = vset.pattern.permute.xlu0 0
          %1701 = vperm.xlu0 %1700, %v1624
          %v1702 = vpop.permute.xlu0 %1701
          %1705 = vset.pattern.permute.xlu0 0
          %1706 = vperm.xlu0 %1705, %v1626
          %v1707 = vpop.permute.xlu0 %1706
          %1710 = vset.pattern.permute.xlu0 0
          %1711 = vperm.xlu0 %1710, %v1628
          %v1712 = vpop.permute.xlu0 %1711
          %1715 = vset.pattern.permute.xlu0 0
          %1716 = vperm.xlu0 %1715, %v1630
          %v1717 = vpop.permute.xlu0 %1716
          %1720 = vset.pattern.permute.xlu0 0
          %1721 = vperm.xlu0 %1720, %v1632
          %v1722 = vpop.permute.xlu0 %1721
          %1725 = vset.pattern.permute.xlu0 0
          %1726 = vperm.xlu0 %1725, %v1634
          %v1727 = vpop.permute.xlu0 %1726
          %1730 = vset.pattern.permute.xlu0 0
          %1731 = vperm.xlu0 %1730, %v1636
          %v1732 = vpop.permute.xlu0 %1731
          %1735 = vset.pattern.permute.xlu0 0
          %1736 = vperm.xlu0 %1735, %v1638
          %v1737 = vpop.permute.xlu0 %1736
          %1740 = vset.pattern.permute.xlu0 0
          %1741 = vperm.xlu0 %1740, %v1640
          %v1742 = vpop.permute.xlu0 %1741
          %1745 = vset.pattern.permute.xlu0 0
          %1746 = vperm.xlu0 %1745, %v1642
          %v1747 = vpop.permute.xlu0 %1746
          %1750 = vset.pattern.permute.xlu0 0
          %1751 = vperm.xlu0 %1750, %v1644
          %v1752 = vpop.permute.xlu0 %1751
          %1755 = vset.pattern.permute.xlu0 0
          %1756 = vperm.xlu0 %1755, %v1646
          %v1757 = vpop.permute.xlu0 %1756
          %v1759 = vmul.f32 %v1663, %v1682
          %v1760 = vmul.f32 %v1664, %v1687
          %v1761 = vmul.f32 %v1665, %v1692
          %v1762 = vmul.f32 %v1666, %v1697
          %v1763 = vmul.f32 %v1667, %v1702
          %v1764 = vmul.f32 %v1668, %v1707
          %v1765 = vmul.f32 %v1669, %v1712
          %v1766 = vmul.f32 %v1670, %v1717
          %v1767 = vmul.f32 %v1671, %v1722
          %v1768 = vmul.f32 %v1672, %v1727
          %v1769 = vmul.f32 %v1673, %v1732
          %v1770 = vmul.f32 %v1674, %v1737
          %v1771 = vmul.f32 %v1675, %v1742
          %v1772 = vmul.f32 %v1676, %v1747
          %v1773 = vmul.f32 %v1677, %v1752
          %v1774 = vmul.f32 %v1678, %v1757
          %1775 = vst.msk [vmem:[%s426] sm:$0xff] %vm517, %v1759
          %1776 = vst.msk [vmem:[%s426 + $0x8] sm:$0xff] %vm517, %v1760
          %1777 = vst.msk [vmem:[%s426 + $0x10] sm:$0xff] %vm517, %v1761
          %1778 = vst.msk [vmem:[%s426 + $0x18] sm:$0xff] %vm517, %v1762
          %1779 = vst.msk [vmem:[%s426 + $0x20] sm:$0xff] %vm517, %v1763
          %1780 = vst.msk [vmem:[%s426 + $0x28] sm:$0xff] %vm517, %v1764
          %1781 = vst.msk [vmem:[%s426 + $0x30] sm:$0xff] %vm517, %v1765
          %1782 = vst.msk [vmem:[%s426 + $0x38] sm:$0xff] %vm517, %v1766
          %1783 = vst.msk [vmem:[%s426 + $0x40] sm:$0xff] %vm517, %v1767
          %1784 = vst.msk [vmem:[%s426 + $0x48] sm:$0xff] %vm517, %v1768
          %1785 = vst.msk [vmem:[%s426 + $0x50] sm:$0xff] %vm517, %v1769
          %1786 = vst.msk [vmem:[%s426 + $0x58] sm:$0xff] %vm517, %v1770
          %1787 = vst.msk [vmem:[%s426 + $0x60] sm:$0xff] %vm517, %v1771
          %1788 = vst.msk [vmem:[%s426 + $0x68] sm:$0xff] %vm517, %v1772
          %1789 = vst.msk [vmem:[%s426 + $0x70] sm:$0xff] %vm517, %v1773
          %1790 = vst.msk [vmem:[%s426 + $0x78] sm:$0xff] %vm517, %v1774
          %v1791 = vld [vmem:[#allocation5] sm:$0xff]
          %v1792 = vld [vmem:[#allocation5 + $0x8] sm:$0xff]
          %v1793 = vld [vmem:[#allocation5 + $0x10] sm:$0xff]
          %v1794 = vld [vmem:[#allocation5 + $0x18] sm:$0xff]
          %v1795 = vld [vmem:[#allocation5 + $0x20] sm:$0xff]
          %v1796 = vld [vmem:[#allocation5 + $0x28] sm:$0xff]
          %v1797 = vld [vmem:[#allocation5 + $0x30] sm:$0xff]
          %v1798 = vld [vmem:[#allocation5 + $0x38] sm:$0xff]
          %v1799 = vld [vmem:[#allocation5 + $0x40] sm:$0xff]
          %v1800 = vld [vmem:[#allocation5 + $0x48] sm:$0xff]
          %v1801 = vld [vmem:[#allocation5 + $0x50] sm:$0xff]
          %v1802 = vld [vmem:[#allocation5 + $0x58] sm:$0xff]
          %v1803 = vld [vmem:[#allocation5 + $0x60] sm:$0xff]
          %v1804 = vld [vmem:[#allocation5 + $0x68] sm:$0xff]
          %v1805 = vld [vmem:[#allocation5 + $0x70] sm:$0xff]
          %v1806 = vld [vmem:[#allocation5 + $0x78] sm:$0xff]
          %v1807 = vsub.f32 %v1791, %v1647
          %v1808 = vsub.f32 %v1792, %v1648
          %v1809 = vsub.f32 %v1793, %v1649
          %v1810 = vsub.f32 %v1794, %v1650
          %v1811 = vsub.f32 %v1795, %v1651
          %v1812 = vsub.f32 %v1796, %v1652
          %v1813 = vsub.f32 %v1797, %v1653
          %v1814 = vsub.f32 %v1798, %v1654
          %v1815 = vsub.f32 %v1799, %v1655
          %v1816 = vsub.f32 %v1800, %v1656
          %v1817 = vsub.f32 %v1801, %v1657
          %v1818 = vsub.f32 %v1802, %v1658
          %v1819 = vsub.f32 %v1803, %v1659
          %v1820 = vsub.f32 %v1804, %v1660
          %v1821 = vsub.f32 %v1805, %v1661
          %v1822 = vsub.f32 %v1806, %v1662
          %v1823 = vmul.f32 %v1807, 1.442695
          %v1824 = vpow.pop %v1823
          %v1825 = vmul.f32 %v1808, 1.442695
          %v1826 = vpow.pop %v1825
          %v1827 = vmul.f32 %v1809, 1.442695
          %v1828 = vpow.pop %v1827
          %v1829 = vmul.f32 %v1810, 1.442695
          %v1830 = vpow.pop %v1829
          %v1831 = vmul.f32 %v1811, 1.442695
          %v1832 = vpow.pop %v1831
          %v1833 = vmul.f32 %v1812, 1.442695
          %v1834 = vpow.pop %v1833
          %v1835 = vmul.f32 %v1813, 1.442695
          %v1836 = vpow.pop %v1835
          %v1837 = vmul.f32 %v1814, 1.442695
          %v1838 = vpow.pop %v1837
          %v1839 = vmul.f32 %v1815, 1.442695
          %v1840 = vpow.pop %v1839
          %v1841 = vmul.f32 %v1816, 1.442695
          %v1842 = vpow.pop %v1841
          %v1843 = vmul.f32 %v1817, 1.442695
          %v1844 = vpow.pop %v1843
          %v1845 = vmul.f32 %v1818, 1.442695
          %v1846 = vpow.pop %v1845
          %v1847 = vmul.f32 %v1819, 1.442695
          %v1848 = vpow.pop %v1847
          %v1849 = vmul.f32 %v1820, 1.442695
          %v1850 = vpow.pop %v1849
          %v1851 = vmul.f32 %v1821, 1.442695
          %v1852 = vpow.pop %v1851
          %v1853 = vmul.f32 %v1822, 1.442695
          %v1854 = vpow.pop %v1853
          %v1855 = vmul.f32 %v1824, %v1616
          %v1856 = vmul.f32 %v1826, %v1618
          %v1857 = vmul.f32 %v1828, %v1620
          %v1858 = vmul.f32 %v1830, %v1622
          %v1859 = vmul.f32 %v1832, %v1624
          %v1860 = vmul.f32 %v1834, %v1626
          %v1861 = vmul.f32 %v1836, %v1628
          %v1862 = vmul.f32 %v1838, %v1630
          %v1863 = vmul.f32 %v1840, %v1632
          %v1864 = vmul.f32 %v1842, %v1634
          %v1865 = vmul.f32 %v1844, %v1636
          %v1866 = vmul.f32 %v1846, %v1638
          %v1867 = vmul.f32 %v1848, %v1640
          %v1868 = vmul.f32 %v1850, %v1642
          %v1869 = vmul.f32 %v1852, %v1644
          %v1870 = vmul.f32 %v1854, %v1646
          %v1871 = vld [vmem:[%s386] sm:$0xff]
          %v1872 = vld [vmem:[%s386 + $0x10] sm:$0xff]
          %v1873 = vld [vmem:[%s386 + $0x20] sm:$0xff]
          %v1874 = vld [vmem:[%s386 + $0x30] sm:$0xff]
          %v1875 = vld [vmem:[%s386 + $0x40] sm:$0xff]
          %v1876 = vld [vmem:[%s386 + $0x50] sm:$0xff]
          %v1877 = vld [vmem:[%s386 + $0x60] sm:$0xff]
          %v1878 = vld [vmem:[%s386 + $0x70] sm:$0xff]
          %v1879 = vld [vmem:[%s386 + $0x80] sm:$0xff]
          %v1880 = vld [vmem:[%s386 + $0x90] sm:$0xff]
          %v1881 = vld [vmem:[%s386 + $0xa0] sm:$0xff]
          %v1882 = vld [vmem:[%s386 + $0xb0] sm:$0xff]
          %v1883 = vld [vmem:[%s386 + $0xc0] sm:$0xff]
          %v1884 = vld [vmem:[%s386 + $0xd0] sm:$0xff]
          %v1885 = vld [vmem:[%s386 + $0xe0] sm:$0xff]
          %v1886 = vld [vmem:[%s386 + $0xf0] sm:$0xff]
          %1888 = vset.pattern.permute.xlu0 0
          %1889 = vperm.xlu0 %1888, %v1855
          %v1890 = vpop.permute.xlu0 %1889
          %1893 = vset.pattern.permute.xlu0 0
          %1894 = vperm.xlu0 %1893, %v1856
          %v1895 = vpop.permute.xlu0 %1894
          %1898 = vset.pattern.permute.xlu0 0
          %1899 = vperm.xlu0 %1898, %v1857
          %v1900 = vpop.permute.xlu0 %1899
          %1903 = vset.pattern.permute.xlu0 0
          %1904 = vperm.xlu0 %1903, %v1858
          %v1905 = vpop.permute.xlu0 %1904
          %1908 = vset.pattern.permute.xlu0 0
          %1909 = vperm.xlu0 %1908, %v1859
          %v1910 = vpop.permute.xlu0 %1909
          %1913 = vset.pattern.permute.xlu0 0
          %1914 = vperm.xlu0 %1913, %v1860
          %v1915 = vpop.permute.xlu0 %1914
          %1918 = vset.pattern.permute.xlu0 0
          %1919 = vperm.xlu0 %1918, %v1861
          %v1920 = vpop.permute.xlu0 %1919
          %1923 = vset.pattern.permute.xlu0 0
          %1924 = vperm.xlu0 %1923, %v1862
          %v1925 = vpop.permute.xlu0 %1924
          %1928 = vset.pattern.permute.xlu0 0
          %1929 = vperm.xlu0 %1928, %v1863
          %v1930 = vpop.permute.xlu0 %1929
          %1933 = vset.pattern.permute.xlu0 0
          %1934 = vperm.xlu0 %1933, %v1864
          %v1935 = vpop.permute.xlu0 %1934
          %1938 = vset.pattern.permute.xlu0 0
          %1939 = vperm.xlu0 %1938, %v1865
          %v1940 = vpop.permute.xlu0 %1939
          %1943 = vset.pattern.permute.xlu0 0
          %1944 = vperm.xlu0 %1943, %v1866
          %v1945 = vpop.permute.xlu0 %1944
          %1948 = vset.pattern.permute.xlu0 0
          %1949 = vperm.xlu0 %1948, %v1867
          %v1950 = vpop.permute.xlu0 %1949
          %1953 = vset.pattern.permute.xlu0 0
          %1954 = vperm.xlu0 %1953, %v1868
          %v1955 = vpop.permute.xlu0 %1954
          %1958 = vset.pattern.permute.xlu0 0
          %1959 = vperm.xlu0 %1958, %v1869
          %v1960 = vpop.permute.xlu0 %1959
          %1963 = vset.pattern.permute.xlu0 0
          %1964 = vperm.xlu0 %1963, %v1870
          %v1965 = vpop.permute.xlu0 %1964
          %v1967 = vmul.f32 %v1871, %v1890
          %v1968 = vmul.f32 %v1872, %v1895
          %v1969 = vmul.f32 %v1873, %v1900
          %v1970 = vmul.f32 %v1874, %v1905
          %v1971 = vmul.f32 %v1875, %v1910
          %v1972 = vmul.f32 %v1876, %v1915
          %v1973 = vmul.f32 %v1877, %v1920
          %v1974 = vmul.f32 %v1878, %v1925
          %v1975 = vmul.f32 %v1879, %v1930
          %v1976 = vmul.f32 %v1880, %v1935
          %v1977 = vmul.f32 %v1881, %v1940
          %v1978 = vmul.f32 %v1882, %v1945
          %v1979 = vmul.f32 %v1883, %v1950
          %v1980 = vmul.f32 %v1884, %v1955
          %v1981 = vmul.f32 %v1885, %v1960
          %v1982 = vmul.f32 %v1886, %v1965
          %1983 = vst [vmem:[%s386] sm:$0xff] %v1967
          %1984 = vst [vmem:[%s386 + $0x10] sm:$0xff] %v1968
          %1985 = vst [vmem:[%s386 + $0x20] sm:$0xff] %v1969
          %1986 = vst [vmem:[%s386 + $0x30] sm:$0xff] %v1970
          %1987 = vst [vmem:[%s386 + $0x40] sm:$0xff] %v1971
          %1988 = vst [vmem:[%s386 + $0x50] sm:$0xff] %v1972
          %1989 = vst [vmem:[%s386 + $0x60] sm:$0xff] %v1973
          %1990 = vst [vmem:[%s386 + $0x70] sm:$0xff] %v1974
          %1991 = vst [vmem:[%s386 + $0x80] sm:$0xff] %v1975
          %1992 = vst [vmem:[%s386 + $0x90] sm:$0xff] %v1976
          %1993 = vst [vmem:[%s386 + $0xa0] sm:$0xff] %v1977
          %1994 = vst [vmem:[%s386 + $0xb0] sm:$0xff] %v1978
          %1995 = vst [vmem:[%s386 + $0xc0] sm:$0xff] %v1979
          %1996 = vst [vmem:[%s386 + $0xd0] sm:$0xff] %v1980
          %1997 = vst [vmem:[%s386 + $0xe0] sm:$0xff] %v1981
          %1998 = vst [vmem:[%s386 + $0xf0] sm:$0xff] %v1982
          %s1999 = scalar_lea.vmem [#allocation5], 128
          %v2000 = vld [vmem:[%s1999] sm:$0xff]
          %v2001 = vld [vmem:[%s1999 + $0x8] sm:$0xff]
          %v2002 = vld [vmem:[%s1999 + $0x10] sm:$0xff]
          %v2003 = vld [vmem:[%s1999 + $0x18] sm:$0xff]
          %v2004 = vld [vmem:[%s1999 + $0x20] sm:$0xff]
          %v2005 = vld [vmem:[%s1999 + $0x28] sm:$0xff]
          %v2006 = vld [vmem:[%s1999 + $0x30] sm:$0xff]
          %v2007 = vld [vmem:[%s1999 + $0x38] sm:$0xff]
          %v2008 = vld [vmem:[%s1999 + $0x40] sm:$0xff]
          %v2009 = vld [vmem:[%s1999 + $0x48] sm:$0xff]
          %v2010 = vld [vmem:[%s1999 + $0x50] sm:$0xff]
          %v2011 = vld [vmem:[%s1999 + $0x58] sm:$0xff]
          %v2012 = vld [vmem:[%s1999 + $0x60] sm:$0xff]
          %v2013 = vld [vmem:[%s1999 + $0x68] sm:$0xff]
          %v2014 = vld [vmem:[%s1999 + $0x70] sm:$0xff]
          %v2015 = vld [vmem:[%s1999 + $0x78] sm:$0xff]
          %v2016 = vsub.f32 %v2000, %v1647
          %v2017 = vsub.f32 %v2001, %v1648
          %v2018 = vsub.f32 %v2002, %v1649
          %v2019 = vsub.f32 %v2003, %v1650
          %v2020 = vsub.f32 %v2004, %v1651
          %v2021 = vsub.f32 %v2005, %v1652
          %v2022 = vsub.f32 %v2006, %v1653
          %v2023 = vsub.f32 %v2007, %v1654
          %v2024 = vsub.f32 %v2008, %v1655
          %v2025 = vsub.f32 %v2009, %v1656
          %v2026 = vsub.f32 %v2010, %v1657
          %v2027 = vsub.f32 %v2011, %v1658
          %v2028 = vsub.f32 %v2012, %v1659
          %v2029 = vsub.f32 %v2013, %v1660
          %v2030 = vsub.f32 %v2014, %v1661
          %v2031 = vsub.f32 %v2015, %v1662
          %v2032 = vmul.f32 %v2016, 1.442695
          %v2033 = vpow.pop %v2032
          %v2034 = vmul.f32 %v2017, 1.442695
          %v2035 = vpow.pop %v2034
          %v2036 = vmul.f32 %v2018, 1.442695
          %v2037 = vpow.pop %v2036
          %v2038 = vmul.f32 %v2019, 1.442695
          %v2039 = vpow.pop %v2038
          %v2040 = vmul.f32 %v2020, 1.442695
          %v2041 = vpow.pop %v2040
          %v2042 = vmul.f32 %v2021, 1.442695
          %v2043 = vpow.pop %v2042
          %v2044 = vmul.f32 %v2022, 1.442695
          %v2045 = vpow.pop %v2044
          %v2046 = vmul.f32 %v2023, 1.442695
          %v2047 = vpow.pop %v2046
          %v2048 = vmul.f32 %v2024, 1.442695
          %v2049 = vpow.pop %v2048
          %v2050 = vmul.f32 %v2025, 1.442695
          %v2051 = vpow.pop %v2050
          %v2052 = vmul.f32 %v2026, 1.442695
          %v2053 = vpow.pop %v2052
          %v2054 = vmul.f32 %v2027, 1.442695
          %v2055 = vpow.pop %v2054
          %v2056 = vmul.f32 %v2028, 1.442695
          %v2057 = vpow.pop %v2056
          %v2058 = vmul.f32 %v2029, 1.442695
          %v2059 = vpow.pop %v2058
          %v2060 = vmul.f32 %v2030, 1.442695
          %v2061 = vpow.pop %v2060
          %v2062 = vmul.f32 %v2031, 1.442695
          %v2063 = vpow.pop %v2062
          %v2064 = vmul.f32 %v2033, %v1616
          %v2065 = vmul.f32 %v2035, %v1618
          %v2066 = vmul.f32 %v2037, %v1620
          %v2067 = vmul.f32 %v2039, %v1622
          %v2068 = vmul.f32 %v2041, %v1624
          %v2069 = vmul.f32 %v2043, %v1626
          %v2070 = vmul.f32 %v2045, %v1628
          %v2071 = vmul.f32 %v2047, %v1630
          %v2072 = vmul.f32 %v2049, %v1632
          %v2073 = vmul.f32 %v2051, %v1634
          %v2074 = vmul.f32 %v2053, %v1636
          %v2075 = vmul.f32 %v2055, %v1638
          %v2076 = vmul.f32 %v2057, %v1640
          %v2077 = vmul.f32 %v2059, %v1642
          %v2078 = vmul.f32 %v2061, %v1644
          %v2079 = vmul.f32 %v2063, %v1646
          %v2080 = vld [vmem:[%s386 + $0x8] sm:$0xff]
          %v2081 = vld [vmem:[%s386 + $0x18] sm:$0xff]
          %v2082 = vld [vmem:[%s386 + $0x28] sm:$0xff]
          %v2083 = vld [vmem:[%s386 + $0x38] sm:$0xff]
          %v2084 = vld [vmem:[%s386 + $0x48] sm:$0xff]
          %v2085 = vld [vmem:[%s386 + $0x58] sm:$0xff]
          %v2086 = vld [vmem:[%s386 + $0x68] sm:$0xff]
          %v2087 = vld [vmem:[%s386 + $0x78] sm:$0xff]
          %v2088 = vld [vmem:[%s386 + $0x88] sm:$0xff]
          %v2089 = vld [vmem:[%s386 + $0x98] sm:$0xff]
          %v2090 = vld [vmem:[%s386 + $0xa8] sm:$0xff]
          %v2091 = vld [vmem:[%s386 + $0xb8] sm:$0xff]
          %v2092 = vld [vmem:[%s386 + $0xc8] sm:$0xff]
          %v2093 = vld [vmem:[%s386 + $0xd8] sm:$0xff]
          %v2094 = vld [vmem:[%s386 + $0xe8] sm:$0xff]
          %v2095 = vld [vmem:[%s386 + $0xf8] sm:$0xff]
          %2097 = vset.pattern.permute.xlu0 0
          %2098 = vperm.xlu0 %2097, %v2064
          %v2099 = vpop.permute.xlu0 %2098
          %2102 = vset.pattern.permute.xlu0 0
          %2103 = vperm.xlu0 %2102, %v2065
          %v2104 = vpop.permute.xlu0 %2103
          %2107 = vset.pattern.permute.xlu0 0
          %2108 = vperm.xlu0 %2107, %v2066
          %v2109 = vpop.permute.xlu0 %2108
          %2112 = vset.pattern.permute.xlu0 0
          %2113 = vperm.xlu0 %2112, %v2067
          %v2114 = vpop.permute.xlu0 %2113
          %2117 = vset.pattern.permute.xlu0 0
          %2118 = vperm.xlu0 %2117, %v2068
          %v2119 = vpop.permute.xlu0 %2118
          %2122 = vset.pattern.permute.xlu0 0
          %2123 = vperm.xlu0 %2122, %v2069
          %v2124 = vpop.permute.xlu0 %2123
          %2127 = vset.pattern.permute.xlu0 0
          %2128 = vperm.xlu0 %2127, %v2070
          %v2129 = vpop.permute.xlu0 %2128
          %2132 = vset.pattern.permute.xlu0 0
          %2133 = vperm.xlu0 %2132, %v2071
          %v2134 = vpop.permute.xlu0 %2133
          %2137 = vset.pattern.permute.xlu0 0
          %2138 = vperm.xlu0 %2137, %v2072
          %v2139 = vpop.permute.xlu0 %2138
          %2142 = vset.pattern.permute.xlu0 0
          %2143 = vperm.xlu0 %2142, %v2073
          %v2144 = vpop.permute.xlu0 %2143
          %2147 = vset.pattern.permute.xlu0 0
          %2148 = vperm.xlu0 %2147, %v2074
          %v2149 = vpop.permute.xlu0 %2148
          %2152 = vset.pattern.permute.xlu0 0
          %2153 = vperm.xlu0 %2152, %v2075
          %v2154 = vpop.permute.xlu0 %2153
          %2157 = vset.pattern.permute.xlu0 0
          %2158 = vperm.xlu0 %2157, %v2076
          %v2159 = vpop.permute.xlu0 %2158
          %2162 = vset.pattern.permute.xlu0 0
          %2163 = vperm.xlu0 %2162, %v2077
          %v2164 = vpop.permute.xlu0 %2163
          %2167 = vset.pattern.permute.xlu0 0
          %2168 = vperm.xlu0 %2167, %v2078
          %v2169 = vpop.permute.xlu0 %2168
          %2172 = vset.pattern.permute.xlu0 0
          %2173 = vperm.xlu0 %2172, %v2079
          %v2174 = vpop.permute.xlu0 %2173
          %v2176 = vmul.f32 %v2080, %v2099
          %v2177 = vmul.f32 %v2081, %v2104
          %v2178 = vmul.f32 %v2082, %v2109
          %v2179 = vmul.f32 %v2083, %v2114
          %v2180 = vmul.f32 %v2084, %v2119
          %v2181 = vmul.f32 %v2085, %v2124
          %v2182 = vmul.f32 %v2086, %v2129
          %v2183 = vmul.f32 %v2087, %v2134
          %v2184 = vmul.f32 %v2088, %v2139
          %v2185 = vmul.f32 %v2089, %v2144
          %v2186 = vmul.f32 %v2090, %v2149
          %v2187 = vmul.f32 %v2091, %v2154
          %v2188 = vmul.f32 %v2092, %v2159
          %v2189 = vmul.f32 %v2093, %v2164
          %v2190 = vmul.f32 %v2094, %v2169
          %v2191 = vmul.f32 %v2095, %v2174
          %2192 = vst [vmem:[%s386 + $0x8] sm:$0xff] %v2176
          %2193 = vst [vmem:[%s386 + $0x18] sm:$0xff] %v2177
          %2194 = vst [vmem:[%s386 + $0x28] sm:$0xff] %v2178
          %2195 = vst [vmem:[%s386 + $0x38] sm:$0xff] %v2179
          %2196 = vst [vmem:[%s386 + $0x48] sm:$0xff] %v2180
          %2197 = vst [vmem:[%s386 + $0x58] sm:$0xff] %v2181
          %2198 = vst [vmem:[%s386 + $0x68] sm:$0xff] %v2182
          %2199 = vst [vmem:[%s386 + $0x78] sm:$0xff] %v2183
          %2200 = vst [vmem:[%s386 + $0x88] sm:$0xff] %v2184
          %2201 = vst [vmem:[%s386 + $0x98] sm:$0xff] %v2185
          %2202 = vst [vmem:[%s386 + $0xa8] sm:$0xff] %v2186
          %2203 = vst [vmem:[%s386 + $0xb8] sm:$0xff] %v2187
          %2204 = vst [vmem:[%s386 + $0xc8] sm:$0xff] %v2188
          %2205 = vst [vmem:[%s386 + $0xd8] sm:$0xff] %v2189
          %2206 = vst [vmem:[%s386 + $0xe8] sm:$0xff] %v2190
          %2207 = vst [vmem:[%s386 + $0xf8] sm:$0xff] %v2191
        $region82: #{tpu_custom_call.1} parent=69 // pred_fallthru
          _
        %s2208 = smul.u32 16, %s26
        %p2209 = scmp.lt.s32.totalorder %s25, 3
        %s2210 = scalar_select %p2209, %s25, 3
        %p2211 = scmp.lt.s32.totalorder %s2208, 31
        %s2212 = scalar_select %p2211, %s2208, 31
        %s2213 = smul.addr %s2210, 32
        %s2214 = sadd.s32 %s2212, %s2213
        %s2215 = smul.addr %s2214, 8
        %s2216 = scalar_lea.vmem %s4, %s2215
        %s2217 = sand.u32 %s189, 1
        %s2218 = scalar_lea.sflag [#allocation8], %s2217
        %s2219 = sand.u32 %s189, 1
        %s2220 = smul.addr %s2219, 256
        %s2221 = scalar_lea.vmem [#allocation7], %s2220
        // Predicated region
        $region83: #{tpu_custom_call.1} parent=69 // pred_check
          %p2222 = pneg %p171
        $region84: #{tpu_custom_call.1} parent=69 // pred_check_branch
          %2224 = sbr.rel (%p2222) target = $region86
        $region85: #{tpu_custom_call.1} parent=69 // pred_region
          %s2225 = smul.u32 16, %s26
        $region86: #{tpu_custom_call.1} parent=69 // pred_fallthru
          _
        // Predicated region
        $region87: #{tpu_custom_call.1} parent=69 // pred_check
          %p2226 = pneg %p199
        $region88: #{tpu_custom_call.1} parent=69 // pred_check_branch
          %2228 = sbr.rel (%p2226) target = $region90
        $region89: #{tpu_custom_call.1} parent=69 // pred_region
          %s2229 = smul.u32 16, %s26
          %s2231 = ssub.s32 4096, 4096
          %2232 = vsyncadd %s2218, %s2231
          %s2233 = smul.addr %s2229, 2
          %s2234 = smul.addr %s25, 64
          %s2235 = sadd.s32 %s2233, %s2234
          %s2236 = smul.addr %s2235, 128
          %s2237 = scalar_lea.hbm %s5, %s2236
          %s2238 = sshll.u32 %s2221, 4
          %s2239 = int_to_ptr.vmem [resolvable:$true] %s2238
          %2244 = dma.vmem_to_hbm [thread:$0]  %s2239, 4096, %s2237, %s2218, 256, 256, 16
        $region90: #{tpu_custom_call.1} parent=69 // pred_fallthru
          _
      $region70: #{tpu_custom_call.1} parent=5 // pred_fallthru
        _
      %p2245 = scmp.le.s32.totalorder 2, %s15
      // Predicated region
      $region91: #{tpu_custom_call.1} parent=5 // pred_check
        %p2246 = pneg %p2245
      $region92: #{tpu_custom_call.1} parent=5 // pred_check_branch
        %2248 = sbr.rel (%p2246) target = $region94
      $region93: #{tpu_custom_call.1} parent=5 // pred_region
        %s2249 = ssub.s32 %s15, 2
        // Predicated region
        $region95: #{tpu_custom_call.1} parent=93 // pred_check
          %p2250 = pneg %p177
        $region96: #{tpu_custom_call.1} parent=93 // pred_check_branch
          %2252 = sbr.rel (%p2250) target = $region98
        $region97: #{tpu_custom_call.1} parent=93 // pred_region
          %s2253 = smul.u32 16, %s29
          %p2254 = scmp.lt.s32.totalorder %s28, 3
          %s2255 = scalar_select %p2254, %s28, 3
          %p2256 = scmp.lt.s32.totalorder %s2253, 31
          %s2257 = scalar_select %p2256, %s2253, 31
          %s2258 = smul.addr %s2255, 32
          %s2259 = sadd.s32 %s2257, %s2258
          %s2260 = smul.addr %s2259, 8
          %s2261 = scalar_lea.vmem %s4, %s2260
        $region98: #{tpu_custom_call.1} parent=93 // pred_fallthru
          _
        // Predicated region
        $region99: #{tpu_custom_call.1} parent=93 // pred_check
          %p2262 = pneg %p205
        $region100: #{tpu_custom_call.1} parent=93 // pred_check_branch
          %2264 = sbr.rel (%p2262) target = $region102
        $region101: #{tpu_custom_call.1} parent=93 // pred_region
          %s2265 = sand.u32 %s190, 1
          %s2266 = scalar_lea.sflag [#allocation8], %s2265
          %s2267 = sand.u32 %s190, 1
          %s2268 = smul.addr %s2267, 256
          %s2269 = scalar_lea.vmem [#allocation7], %s2268
          %2270 = dma.done %s2266, 4096
        $region102: #{tpu_custom_call.1} parent=93 // pred_fallthru
          _
      $region94: #{tpu_custom_call.1} parent=5 // pred_fallthru
        _
    $region6: #{tpu_custom_call.1} parent=1 // loop_footer
      %s19 = sadd.s32 1, %s15
    $region7: #{tpu_custom_call.1} parent=1 // loop_footer_branch
      %14 = sbr.rel target = $region3
    $region8: #{tpu_custom_call.1} parent=1 // loop_exit
      _
    %2271 = vsyncpa [#allocation8], 1
    %s2272 = scalar_lea.sflag [#allocation8], 1
    %2273 = vsyncpa %s2272, 1

</llo_original>
